<compile_context>
chip_gen: v7x
topology: tpu7x:2x2x1
jax: 0.10.0
libtpu: 0.0.40
codegen_flags: <defaults>
</compile_context>

<pallas_src>
import math

import jax
import jax.numpy as jnp
import numpy as np
from jax.experimental import pallas as pl
from jax.experimental.pallas import tpu as pltpu

_ALPHA = 0.05            # _SNReweight default alpha
_SN_EPS = 1e-12          # torch _SpectralNorm default eps (normalize + sigma)

# TODO(synk): init_norm_to_current=True (20-iteration init-time sigma) is an
# __init__-time path only; it stays in host-side init, not in the kernel.


# --------------------------- pass 1: sigma / u / v ---------------------------

def _sigma_kernel(w_ref, v_ref, u_out_ref, v_out_ref, sigma_ref,
                  wv_ref, wtu_ref, sq_ref):
    """One grid step == one row tile of one chunk.

    Accumulated across the inner ("arbitrary") row-tile axis:
      wv_ref  (n_r, TR): unnormalized (W v) rows of this chunk
      wtu_ref (1,  C)  : unnormalized W^T (W v)   (== W^T u up to 1/||Wv||)
      sq_ref  (1,  1)  : ||W v||^2
    u_new / v_new / sigma are finalized at the last row tile.
    """
    r = pl.program_id(1)
    n_r = pl.num_programs(1)

    @pl.when(r == 0)
    def _init():
        wtu_ref[...] = jnp.zeros_like(wtu_ref)
        sq_ref[...] = jnp.zeros_like(sq_ref)

    w = w_ref[...]                                    # (TR, C), storage dtype
    v_row = v_ref[0].astype(w.dtype)                  # (1, C)

    # wv_tile = v @ W_tile^T  -> (1, TR)   (MXU, f32 accumulate)
    wv_t = jax.lax.dot_general(
        v_row, w, (((1,), (1,)), ((), ())),
        precision=jax.lax.Precision.HIGHEST,
        preferred_element_type=jnp.float32)

    # stash this tile's rows of (W v) for u_new (lane-dense row of scratch)
    wv_ref[pl.ds(r, 1), :] = wv_t

    # accumulate ||W v||^2 and W_tile^T @ (W_tile v)
    sq_ref[...] += jnp.sum(wv_t * wv_t, keepdims=True)
    wtu_ref[...] += jax.lax.dot_general(
        wv_t.astype(w.dtype), w, (((1,), (0,)), ((), ())),
        precision=jax.lax.Precision.HIGHEST,
        preferred_element_type=jnp.float32)

    @pl.when(r == n_r - 1)
    def _finalize():
        # u = (W v) / max(||W v||, eps)
        d = jnp.maximum(jnp.sqrt(sq_ref[...]), _SN_EPS)          # (1, 1)
        u_out_ref[0] = wv_ref[...] / d                           # (n_r, TR)
        # W^T u == (W^T (W v)) / max(||W v||, eps)
        wtu = wtu_ref[...] / d                                   # (1, C)
        n_sq = jnp.sum(wtu * wtu, keepdims=True)                 # (1, 1)
        n = jnp.sqrt(n_sq)
        m = jnp.maximum(n, _SN_EPS)
        v_out_ref[0] = wtu / m
        # sigma = u.(W v_new) + eps == ||W^T u||^2 / max(||W^T u||, eps) + eps
        sigma_ref[0] = n_sq / m + _SN_EPS


# ------------------------------ pass 2: rescale ------------------------------

def _rescale_kernel(factor_ref, w_ref, y_ref):
    """y_tile = W_tile * factor[chunk]; factor is a per-chunk SMEM table."""
    c = pl.program_id(0)
    f = factor_ref[c]                                 # f32 scalar from SMEM
    # Keep the tile in its storage dtype; only the scalar is cast.  (For bf16
    # weights this is one extra bf16 rounding of the factor vs torch's f32
    # path — accepted per review.)
    y_ref[...] = (w_ref[...] * f.astype(w_ref.dtype)).astype(y_ref.dtype)


# --------------------------------- wrapper -----------------------------------

def _pick_row_tile(rows, target=512):
    """Largest multiple-of-8 divisor of `rows` that is <= target."""
    if rows <= target:
        return rows
    t = (target // 8) * 8
    while t >= 8:
        if rows % t == 0:
            return t
        t -= 8
    return rows


def chunked_sn_reweight(weight, v, scale, num_chunks, *, row_tile=None):
    """weight: (O, C); v: (num_chunks, 1, C) f32; scale: (num_chunks, 1, 1) f32.

    Returns (y, u_new, v_new, sigma):
      y      (O, C)               concat_c  W_c * (softplus(scale_c)+alpha)/sigma_c
      u_new  (num_chunks, R) f32  updated power-iteration left vectors
      v_new  (num_chunks, C) f32  updated power-iteration right vectors
      sigma  (num_chunks,)   f32
    (u_old is not an input: with n_power_iterations=1 the torch forward
     overwrites _u before it is ever read.)
    """
    O, C = weight.shape
    assert O % num_chunks == 0
    R = O // num_chunks
    if row_tile is None:
        row_tile = _pick_row_tile(R)
    assert R % row_tile == 0 and (row_tile % 8 == 0 or row_tile == R)
    n_r = R // row_tile

    # ---- pass 1: per-chunk power-iteration step + sigma (reads W once) ----
    u_raw, v_new, sigma = pl.pallas_call(
        _sigma_kernel,
        out_shape=(
            jax.ShapeDtypeStruct((num_chunks, n_r, row_tile), jnp.float32),
            jax.ShapeDtypeStruct((num_chunks, 1, C), jnp.float32),
            jax.ShapeDtypeStruct((num_chunks, 1, 1), jnp.float32),
        ),
        grid_spec=pltpu.PrefetchScalarGridSpec(
            num_scalar_prefetch=0,
            grid=(num_chunks, n_r),
            in_specs=[
                pl.BlockSpec((row_tile, C), lambda c, r: (c * n_r + r, 0)),
                pl.BlockSpec((1, 1, C), lambda c, r: (c, 0, 0)),
            ],
            out_specs=[
                pl.BlockSpec((1, n_r, row_tile), lambda c, r: (c, 0, 0)),
                pl.BlockSpec((1, 1, C), lambda c, r: (c, 0, 0)),
                pl.BlockSpec((1, 1, 1), lambda c, r: (c, 0, 0)),
            ],
            scratch_shapes=[
                pltpu.VMEM((n_r, row_tile), jnp.float32),   # unnormalized W v
                pltpu.VMEM((1, C), jnp.float32),            # unnormalized W^T u
                pltpu.VMEM((1, 1), jnp.float32),            # ||W v||^2
            ],
        ),
        compiler_params=pltpu.CompilerParams(
            dimension_semantics=("parallel", "arbitrary"),
            vmem_limit_bytes=64 * 1024 * 1024),
    )(weight, v)

    sigma = sigma.reshape(num_chunks)
    u_new = u_raw.reshape(num_chunks, R)
    v_new = v_new.reshape(num_chunks, C)

    # scalar path (version==2): scale = softplus(p) + alpha ; factor = scale/sigma
    factor = ((jax.nn.softplus(scale.reshape(num_chunks)) + _ALPHA)
              / sigma).astype(jnp.float32)

    # ---- pass 2: mem-bound streaming rescale  y = W * factor[chunk] ----
    y = pl.pallas_call(
        _rescale_kernel,
        out_shape=jax.ShapeDtypeStruct((O, C), weight.dtype),
        grid_spec=pltpu.PrefetchScalarGridSpec(
            num_scalar_prefetch=0,
            grid=(num_chunks, n_r),
            in_specs=[
                pl.BlockSpec(memory_space=pltpu.MemorySpace.SMEM),  # factor table
                pl.BlockSpec((row_tile, C), lambda c, r: (c * n_r + r, 0)),
            ],
            out_specs=pl.BlockSpec((row_tile, C), lambda c, r: (c * n_r + r, 0)),
        ),
        compiler_params=pltpu.CompilerParams(
            dimension_semantics=("parallel", "parallel"),
            vmem_limit_bytes=64 * 1024 * 1024),
    )(factor, weight)

    return y, u_new, v_new, sigma


# ----------------------------- init / reference ------------------------------

def _normalize(x, eps=_SN_EPS):
    return x / jnp.maximum(jnp.linalg.norm(x), eps)


def init_params(key, out_features, in_features, num_chunks):
    """Deterministic synthetic init mirroring _ChunkedSNReweight.__init__
    (init_norm_to_current=False, version=2)."""
    R = out_features // num_chunks
    kw, ku, kv = jax.random.split(key, 3)
    weight = (jax.random.normal(kw, (out_features, in_features), jnp.float32)
              * 0.02)
    u0 = jax.random.normal(ku, (num_chunks, R), jnp.float32)
    v0 = jax.random.normal(kv, (num_chunks, in_features), jnp.float32)

    # _SpectralNorm.__init__: normalize + 15 warm-up power iterations (init only).
    v_list = []
    for c in range(num_chunks):
        wmat = weight[c * R:(c + 1) * R]
        uu, vv = _normalize(u0[c]), _normalize(v0[c])
        for _ in range(15):
            uu = _normalize(wmat @ vv)
            vv = _normalize(wmat.T @ uu)
        v_list.append(vv)
    v = jnp.stack(v_list).reshape(num_chunks, 1, in_features)

    # version==2 scale init: softplus(init_value) + alpha == 1.0
    init_value = math.log(math.exp(1.0 - _ALPHA) - 1.0)
    scale = jnp.full((num_chunks, 1, 1), init_value, jnp.float32)
    return weight, v, scale


def reference_forward(weight, v, scale, num_chunks):
    """float64 numpy mirror of the PyTorch forward (training mode, 1 power iter)."""
    w_all = np.asarray(weight, dtype=np.float64)
    v_all = np.asarray(v, dtype=np.float64)
    s_all = np.asarray(scale, dtype=np.float64)
    O, C = w_all.shape
    R = O // num_chunks

    def nrm(x):
        return x / max(np.linalg.norm(x), _SN_EPS)

    ys, us, vs, sigmas = [], [], [], []
    for c in range(num_chunks):
        w = w_all[c * R:(c + 1) * R]
        vv = v_all[c, 0]
        uu = nrm(w @ vv)
        vv = nrm(w.T @ uu)
        sigma = float(uu @ (w @ vv)) + _SN_EPS
        sc = np.log1p(np.exp(s_all[c, 0, 0])) + _ALPHA      # softplus + alpha
        ys.append(w * (sc / sigma))
        us.append(uu)
        vs.append(vv)
        sigmas.append(sigma)
    return (np.concatenate(ys, axis=0), np.stack(us), np.stack(vs),
            np.asarray(sigmas))


if __name__ == "__main__":
    num_chunks = 3                      # fused-QKV-style weight
    hidden = 128                        # in_features (lane-dense: multiple of 128)
    out_features, in_features = num_chunks * hidden, hidden   # weight: (384, 128)

    key = jax.random.PRNGKey(0)
    weight, v, scale = init_params(key, out_features, in_features, num_chunks)

    # row_tile=64 -> 2 row tiles per chunk, so the accumulation path is exercised.
    y, u_new, v_new, sigma = chunked_sn_reweight(
        weight, v, scale, num_chunks, row_tile=64)
    jax.block_until_ready((y, u_new, v_new, sigma))

    y_ref, u_ref, v_ref, sigma_ref = reference_forward(weight, v, scale, num_chunks)
    np.testing.assert_allclose(np.asarray(y), y_ref, rtol=1e-4, atol=1e-6)
    np.testing.assert_allclose(np.asarray(sigma), sigma_ref, rtol=1e-4, atol=1e-7)
    np.testing.assert_allclose(np.asarray(u_new), u_ref, rtol=1e-3, atol=1e-5)
    np.testing.assert_allclose(np.asarray(v_new), v_ref, rtol=1e-3, atol=1e-5)

    print("KERNEL_OK")
</pallas_src>

<mosaic_0001>
module attributes {stable_mosaic.version = 11 : i64} {
  func.func @_sigma_kernel(%arg0: i32, %arg1: i32, %arg2: memref<64x128xf32, #tpu.memory_space<vmem>>, %arg3: memref<1x1x128xf32, #tpu.memory_space<vmem>>, %arg4: memref<1x2x64xf32, #tpu.memory_space<vmem>>, %arg5: memref<1x1x128xf32, #tpu.memory_space<vmem>>, %arg6: memref<1x1x1xf32, #tpu.memory_space<vmem>>, %arg7: memref<2x64xf32, #tpu.memory_space<vmem>>, %arg8: memref<1x128xf32, #tpu.memory_space<vmem>>, %arg9: memref<1x1xf32, #tpu.memory_space<vmem>>) attributes {dimension_semantics = [#tpu.dimension_semantics<parallel>, #tpu.dimension_semantics<arbitrary>], iteration_bounds = array<i64: 3, 2>, scalar_prefetch = 0 : i64, scratch_operands = 3 : i64, tpu.core_type = #tpu.core_type<tc>, window_params = [{transform_indices = @transform_0, window_bounds = array<i64: 64, 128>}, {transform_indices = @transform_1, window_bounds = array<i64: 1, 1, 128>}, {transform_indices = @transform_2, window_bounds = array<i64: 1, 2, 64>}, {transform_indices = @transform_3, window_bounds = array<i64: 1, 1, 128>}, {transform_indices = @transform_4, window_bounds = array<i64: 1, 1, 1>}]} {
    %c0_i32 = arith.constant 0 : i32
    %0 = arith.cmpi eq, %arg1, %c0_i32 : i32
    %1 = arith.extui %0 : i1 to i32
    %c0_i32_0 = arith.constant 0 : i32
    %2 = arith.cmpi ne, %1, %c0_i32_0 : i32
    scf.if %2 {
      %cst_17 = arith.constant 0.000000e+00 : f32
      %25 = vector.broadcast %cst_17 : f32 to vector<1x128xf32>
      %c0_18 = arith.constant 0 : index
      %c0_19 = arith.constant 0 : index
      %26 = vector.load %arg8[%c0_18, %c0_19] : memref<1x128xf32, #tpu.memory_space<vmem>>, vector<1x128xf32>
      tpu.vector_store %arg8[%c0_18, %c0_19], %25 {strides = array<i32>} : memref<1x128xf32, #tpu.memory_space<vmem>>, vector<1x128xf32>,
      %cst_20 = arith.constant 0.000000e+00 : f32
      %27 = vector.broadcast %cst_20 : f32 to vector<1x1xf32>
      %c0_21 = arith.constant 0 : index
      %c0_22 = arith.constant 0 : index
      %28 = vector.load %arg9[%c0_21, %c0_22] : memref<1x1xf32, #tpu.memory_space<vmem>>, vector<1x1xf32>
      tpu.vector_store %arg9[%c0_21, %c0_22], %27 {strides = array<i32>} : memref<1x1xf32, #tpu.memory_space<vmem>>, vector<1x1xf32>,
    } else {
    }
    %c0 = arith.constant 0 : index
    %c0_1 = arith.constant 0 : index
    %3 = vector.load %arg2[%c0, %c0_1] : memref<64x128xf32, #tpu.memory_space<vmem>>, vector<64x128xf32>
    %c0_2 = arith.constant 0 : index
    %c0_3 = arith.constant 0 : index
    %c0_4 = arith.constant 0 : index
    %4 = vector.load %arg3[%c0_2, %c0_3, %c0_4] : memref<1x1x128xf32, #tpu.memory_space<vmem>>, vector<1x1x128xf32>
    %5 = vector.shape_cast %4 : vector<1x1x128xf32> to vector<1x128xf32>
    %cst = arith.constant dense<0.000000e+00> : vector<1x64xf32>
    %6 = tpu.matmul %5, %3, %cst {dimension_numbers = #tpu.dot_dimension_numbers<[1], [1], [0], [0], [0, 0, 1, 0], [], []>, precision = #tpu.contract_precision<fp32>} : vector<1x128xf32>, vector<64x128xf32>, vector<1x64xf32> -> vector<1x64xf32>
    %7 = arith.index_cast %arg1 : i32 to index
    %c0_5 = arith.constant 0 : index
    %8 = vector.load %arg7[%7, %c0_5] : memref<2x64xf32, #tpu.memory_space<vmem>>, vector<1x64xf32>
    tpu.vector_store %arg7[%7, %c0_5], %6 {strides = array<i32>} : memref<2x64xf32, #tpu.memory_space<vmem>>, vector<1x64xf32>,
    %c0_6 = arith.constant 0 : index
    %c0_7 = arith.constant 0 : index
    %9 = vector.load %arg9[%c0_6, %c0_7] : memref<1x1xf32, #tpu.memory_space<vmem>>, vector<1x1xf32>
    %10 = arith.mulf %6, %6 : vector<1x64xf32>
    %11 = vector.shape_cast %10 : vector<1x64xf32> to vector<1x1x64xf32>
    %cst_8 = arith.constant dense<0.000000e+00> : vector<1xf32>
    %12 = vector.multi_reduction <add>, %11, %cst_8 [1, 2] : vector<1x1x64xf32> to vector<1xf32>
    %13 = vector.shape_cast %12 : vector<1xf32> to vector<1x1x1xf32>
    %14 = vector.extract %13[0, 0, 0] : f32 from vector<1x1x1xf32>
    %15 = vector.broadcast %14 : f32 to vector<1x1xf32>
    %16 = arith.addf %9, %15 : vector<1x1xf32>
    %c0_9 = arith.constant 0 : index
    %c0_10 = arith.constant 0 : index
    %17 = vector.load %arg9[%c0_9, %c0_10] : memref<1x1xf32, #tpu.memory_space<vmem>>, vector<1x1xf32>
    tpu.vector_store %arg9[%c0_9, %c0_10], %16 {strides = array<i32>} : memref<1x1xf32, #tpu.memory_space<vmem>>, vector<1x1xf32>,
    %c0_11 = arith.constant 0 : index
    %c0_12 = arith.constant 0 : index
    %18 = vector.load %arg8[%c0_11, %c0_12] : memref<1x128xf32, #tpu.memory_space<vmem>>, vector<1x128xf32>
    %cst_13 = arith.constant dense<0.000000e+00> : vector<1x128xf32>
    %19 = tpu.matmul %6, %3, %cst_13 {dimension_numbers = #tpu.dot_dimension_numbers<[1], [0], [0], [1], [0, 0, 1, 1], [], []>, precision = #tpu.contract_precision<fp32>} : vector<1x64xf32>, vector<64x128xf32>, vector<1x128xf32> -> vector<1x128xf32>
    %20 = arith.addf %18, %19 : vector<1x128xf32>
    %c0_14 = arith.constant 0 : index
    %c0_15 = arith.constant 0 : index
    %21 = vector.load %arg8[%c0_14, %c0_15] : memref<1x128xf32, #tpu.memory_space<vmem>>, vector<1x128xf32>
    tpu.vector_store %arg8[%c0_14, %c0_15], %20 {strides = array<i32>} : memref<1x128xf32, #tpu.memory_space<vmem>>, vector<1x128xf32>,
    %c1_i32 = arith.constant 1 : i32
    %22 = arith.cmpi eq, %arg1, %c1_i32 : i32
    %23 = arith.extui %22 : i1 to i32
    %c0_i32_16 = arith.constant 0 : i32
    %24 = arith.cmpi ne, %23, %c0_i32_16 : i32
    scf.if %24 {
      %c0_17 = arith.constant 0 : index
      %c0_18 = arith.constant 0 : index
      %25 = vector.load %arg9[%c0_17, %c0_18] : memref<1x1xf32, #tpu.memory_space<vmem>>, vector<1x1xf32>
      %26 = math.sqrt %25 : vector<1x1xf32>
      %cst_19 = arith.constant 9.99999996E-13 : f32
      %27 = vector.broadcast %cst_19 : f32 to vector<1x1xf32>
      %28 = arith.maximumf %26, %27 : vector<1x1xf32>
      %c0_20 = arith.constant 0 : index
      %c0_21 = arith.constant 0 : index
      %29 = vector.load %arg7[%c0_20, %c0_21] : memref<2x64xf32, #tpu.memory_space<vmem>>, vector<2x64xf32>
      %30 = vector.broadcast %28 : vector<1x1xf32> to vector<2x64xf32>
      %31 = arith.divf %29, %30 : vector<2x64xf32>
      %c0_22 = arith.constant 0 : index
      %c0_23 = arith.constant 0 : index
      %c0_24 = arith.constant 0 : index
      %32 = vector.load %arg4[%c0_22, %c0_23, %c0_24] : memref<1x2x64xf32, #tpu.memory_space<vmem>>, vector<1x2x64xf32>
      %33 = vector.shape_cast %32 : vector<1x2x64xf32> to vector<2x64xf32>
      %34 = vector.shape_cast %31 : vector<2x64xf32> to vector<1x2x64xf32>
      tpu.vector_store %arg4[%c0_22, %c0_23, %c0_24], %34 {strides = array<i32>} : memref<1x2x64xf32, #tpu.memory_space<vmem>>, vector<1x2x64xf32>,
      %c0_25 = arith.constant 0 : index
      %c0_26 = arith.constant 0 : index
      %35 = vector.load %arg8[%c0_25, %c0_26] : memref<1x128xf32, #tpu.memory_space<vmem>>, vector<1x128xf32>
      %36 = vector.broadcast %28 : vector<1x1xf32> to vector<1x128xf32>
      %37 = arith.divf %35, %36 : vector<1x128xf32>
      %38 = arith.mulf %37, %37 : vector<1x128xf32>
      %39 = vector.shape_cast %38 : vector<1x128xf32> to vector<1x1x128xf32>
      %cst_27 = arith.constant dense<0.000000e+00> : vector<1xf32>
      %40 = vector.multi_reduction <add>, %39, %cst_27 [1, 2] : vector<1x1x128xf32> to vector<1xf32>
      %41 = vector.shape_cast %40 : vector<1xf32> to vector<1x1x1xf32>
      %42 = vector.extract %41[0, 0, 0] : f32 from vector<1x1x1xf32>
      %43 = vector.broadcast %42 : f32 to vector<1x1xf32>
      %44 = math.sqrt %43 : vector<1x1xf32>
      %cst_28 = arith.constant 9.99999996E-13 : f32
      %45 = vector.broadcast %cst_28 : f32 to vector<1x1xf32>
      %46 = arith.maximumf %44, %45 : vector<1x1xf32>
      %47 = vector.broadcast %46 : vector<1x1xf32> to vector<1x128xf32>
      %48 = arith.divf %37, %47 : vector<1x128xf32>
      %c0_29 = arith.constant 0 : index
      %c0_30 = arith.constant 0 : index
      %c0_31 = arith.constant 0 : index
      %49 = vector.load %arg5[%c0_29, %c0_30, %c0_31] : memref<1x1x128xf32, #tpu.memory_space<vmem>>, vector<1x1x128xf32>
      %50 = vector.shape_cast %49 : vector<1x1x128xf32> to vector<1x128xf32>
      %51 = vector.shape_cast %48 : vector<1x128xf32> to vector<1x1x128xf32>
      tpu.vector_store %arg5[%c0_29, %c0_30, %c0_31], %51 {strides = array<i32>} : memref<1x1x128xf32, #tpu.memory_space<vmem>>, vector<1x1x128xf32>,
      %52 = arith.divf %43, %46 : vector<1x1xf32>
      %cst_32 = arith.constant 9.99999996E-13 : f32
      %53 = vector.broadcast %cst_32 : f32 to vector<1x1xf32>
      %54 = arith.addf %52, %53 : vector<1x1xf32>
      %c0_33 = arith.constant 0 : index
      %c0_34 = arith.constant 0 : index
      %c0_35 = arith.constant 0 : index
      %55 = vector.load %arg6[%c0_33, %c0_34, %c0_35] : memref<1x1x1xf32, #tpu.memory_space<vmem>>, vector<1x1x1xf32>
      %56 = vector.shape_cast %55 : vector<1x1x1xf32> to vector<1x1xf32>
      %57 = vector.shape_cast %54 : vector<1x1xf32> to vector<1x1x1xf32>
      tpu.vector_store %arg6[%c0_33, %c0_34, %c0_35], %57 {strides = array<i32>} : memref<1x1x1xf32, #tpu.memory_space<vmem>>, vector<1x1x1xf32>,
    } else {
    }
    return
  }
  func.func @transform_0(%arg0: i32, %arg1: i32) -> (i32, i32) {
    %c2_i32 = arith.constant 2 : i32
    %0 = arith.muli %arg0, %c2_i32 : i32
    %1 = arith.addi %0, %arg1 : i32
    %c0_i32 = arith.constant 0 : i32
    %c0_i32_0 = arith.constant 0 : i32
    return %1, %c0_i32 : i32, i32
  }
  func.func @transform_1(%arg0: i32, %arg1: i32) -> (i32, i32, i32) {
    %c0_i32 = arith.constant 0 : i32
    %c0_i32_0 = arith.constant 0 : i32
    %c0_i32_1 = arith.constant 0 : i32
    return %arg0, %c0_i32, %c0_i32_0 : i32, i32, i32
  }
  func.func @transform_2(%arg0: i32, %arg1: i32) -> (i32, i32, i32) {
    %c0_i32 = arith.constant 0 : i32
    %c0_i32_0 = arith.constant 0 : i32
    %c0_i32_1 = arith.constant 0 : i32
    return %arg0, %c0_i32, %c0_i32_0 : i32, i32, i32
  }
  func.func @transform_3(%arg0: i32, %arg1: i32) -> (i32, i32, i32) {
    %c0_i32 = arith.constant 0 : i32
    %c0_i32_0 = arith.constant 0 : i32
    %c0_i32_1 = arith.constant 0 : i32
    return %arg0, %c0_i32, %c0_i32_0 : i32, i32, i32
  }
  func.func @transform_4(%arg0: i32, %arg1: i32) -> (i32, i32, i32) {
    %c0_i32 = arith.constant 0 : i32
    %c0_i32_0 = arith.constant 0 : i32
    %c0_i32_1 = arith.constant 0 : i32
    return %arg0, %c0_i32, %c0_i32_0 : i32, i32, i32
  }
}

</mosaic_0001>

<llo_original>
// kernel: tpu_custom_call.1
$region0: #{tpu_custom_call.1}
  #allocation0 [shape = 'u32[]', space=smem, size = 0x4, offset = 0x4, fixed_abs, tag = 'smem constant byte address 0x4 - core index']
  #allocation1 [shape = 'u32[144,128]{1,0:T(1,128)}', space=vmem, size = 0x12000, scoped, tag = 'internal scratch']
  #allocation2 [shape = 'f32[2,64]{1,0:T(2,128)}', space=vmem, size = 0x400, scoped, tag = 'scratch operand']
  #allocation3 [shape = 'f32[1,128]{1,0:T(1,128)}', space=vmem, size = 0x200, scoped, tag = 'scratch operand']
  #allocation4 [shape = 'f32[1,1]{1,0:T(1,128)}', space=vmem, size = 0x200, scoped, tag = 'scratch operand']
  %s0 = inlined_call_operand.hbm [shape: f32[384,128], index: 0, kind: input, shape index: {}]
  %s1 = inlined_call_operand.hbm [shape: f32[3,1,128], index: 1, kind: input, shape index: {}]
  %s2 = inlined_call_operand.hbm [shape: f32[3,2,64], index: 2, kind: output, shape index: {0}]
  %s3 = inlined_call_operand.hbm [shape: f32[3,1,128], index: 3, kind: output, shape index: {1}]
  %s4 = inlined_call_operand.hbm [shape: f32[3,1,1], index: 4, kind: output, shape index: {2}]
  %5 = xla_tuple %s2, %s3, %s4
  %s6 = sld [smem:[#allocation0]]
  $region73: #{tpu_custom_call.1} parent=0
    _
  %s8 = ssub.s32 1, %s6
  %s9 = scalar_select 0, %s8, %s6
  $region1: #{tpu_custom_call.1} parent=0
    #allocation5 [shape = 'u8[65536]{0}', space=vmem, size = 0x10000, scoped, tag = 'input window, operand 0']
    #allocation6 [shape = 's32[2]{0}', space=sflag, size = 0x8, scoped, tag = 'scoped memory for tpu_custom_call.1']
    #allocation7 [shape = 's32[2]{0}', space=sflag, size = 0x8, scoped, tag = 'scoped memory for tpu_custom_call.1']
    #allocation8 [shape = 'u8[1024]{0}', space=vmem, size = 0x400, scoped, tag = 'input window, operand 1']
    #allocation9 [shape = 's32[2]{0}', space=sflag, size = 0x8, scoped, tag = 'scoped memory for tpu_custom_call.1']
    #allocation10 [shape = 'u8[2048]{0}', space=vmem, size = 0x800, scoped, tag = 'output window, operand 0']
    #allocation11 [shape = 'u8[1024]{0}', space=vmem, size = 0x400, scoped, tag = 'output window, operand 1']
    #allocation12 [shape = 's32[2]{0}', space=sflag, size = 0x8, scoped, tag = 'scoped memory for tpu_custom_call.1']
    #allocation13 [shape = 'u8[1024]{0}', space=vmem, size = 0x400, scoped, tag = 'output window, operand 2']
    %10 = vsyncpa [#allocation6], 0
    %s11 = scalar_lea.sflag [#allocation6], 1
    %12 = vsyncpa %s11, 0
    %13 = vsyncpa [#allocation9], 0
    %s14 = scalar_lea.sflag [#allocation9], 1
    %15 = vsyncpa %s14, 0
    %16 = vsyncpa [#allocation7], 0
    %s17 = scalar_lea.sflag [#allocation7], 1
    %18 = vsyncpa %s17, 0
    %19 = vsyncpa [#allocation12], 0
    %s20 = scalar_lea.sflag [#allocation12], 1
    %21 = vsyncpa %s20, 0
    loop: start=0, step=1, limit=8
    $region2: #{tpu_custom_call.1} parent=1 // loop_pre_header
      _
    $region3: #{tpu_custom_call.1} parent=1 // loop_header
      %s23 = sphi 0, %s27
      %p24 = scmp.ge.s32.totalorder %s23, 8
      %s30 = sphi 0, %s42
      %s31 = sphi 0, %s38
      %s32 = sphi 0, %s30
      %s33 = sphi 0, %s31
      %s34 = sphi 0, %s32
      %s35 = sphi 0, %s33
      %s49 = sphi 0, %s51
      %s52 = sphi 0, %s49
      %s53 = sphi 0, %s52
      %s69 = sphi 0, %s53
      %s75 = sphi 0, %s77
      %s78 = sphi 0, %s75
      %s79 = sphi 0, %s78
      %s95 = sphi 0, %s79
      %s101 = sphi 0, %s103
      %s104 = sphi 0, %s101
      %s105 = sphi 0, %s104
      %s121 = sphi 0, %s105
      %s127 = sphi 0, %s129
      %s130 = sphi 0, %s127
      %s131 = sphi 0, %s130
      %s147 = sphi 0, %s131
      %s153 = sphi 0, %s155
      %s156 = sphi 0, %s153
      %s157 = sphi 0, %s156
      %s173 = sphi 0, %s157
    $region4: #{tpu_custom_call.1} parent=1 // loop_header_branch
      %26 = sbr.rel (%p24) target = $region8
    $region5: #{tpu_custom_call.1} parent=1 // loop_body
      %s28 = ssub.s32 %s23, 1
      %s29 = ssub.s32 %s23, 2
      %s36 = sadd.s32 1, %s31
      %p37 = scmp.ge.s32.totalorder %s36, 2
      %s38 = scalar_select %p37, 0, %s36
      %s39 = sadd.s32 1, %s30
      %s40 = scalar_select %p37, %s39, %s30
      %p41 = scmp.ge.s32.totalorder %s40, 3
      %s42 = scalar_select %p41, 0, %s40
      %s43 = smul.u32 %s30, 2
      %s44 = sadd.s32 %s43, %s31
      %s45 = smul.u32 %s42, 2
      %s46 = sadd.s32 %s45, %s38
      %s47 = ssub.s32 %s44, %s46
      %p48 = scmp.eq.s32.totalorder %s47, 0
      %s50 = sadd.s32 %s49, 1
      %s51 = scalar_select %p48, %s49, %s50
      %p54 = pneg %p48
      %p55 = scmp.eq.s32.totalorder %s23, 5
      %p56 = por %p54, %p55
      %p57 = scmp.ne.s32.totalorder %s49, %s52
      %p58 = scmp.eq.s32.totalorder %s23, 0
      %p59 = por %p57, %p58
      %p60 = scmp.ne.s32.totalorder %s49, %s52
      %p61 = scmp.eq.s32.totalorder %s28, 5
      %p62 = por %p60, %p61
      %p63 = scmp.ne.s32.totalorder %s52, %s53
      %p64 = scmp.eq.s32.totalorder %s28, 0
      %p65 = por %p63, %p64
      %p66 = scmp.ne.s32.totalorder %s52, %s53
      %p67 = scmp.eq.s32.totalorder %s29, 5
      %p68 = por %p66, %p67
      %p70 = scmp.ne.s32.totalorder %s53, %s69
      %p71 = scmp.eq.s32.totalorder %s29, 0
      %p72 = por %p70, %p71
      %s73 = ssub.s32 %s30, %s42
      %p74 = scmp.eq.s32.totalorder %s73, 0
      %s76 = sadd.s32 %s75, 1
      %s77 = scalar_select %p74, %s75, %s76
      %p80 = pneg %p74
      %p81 = scmp.eq.s32.totalorder %s23, 5
      %p82 = por %p80, %p81
      %p83 = scmp.ne.s32.totalorder %s75, %s78
      %p84 = scmp.eq.s32.totalorder %s23, 0
      %p85 = por %p83, %p84
      %p86 = scmp.ne.s32.totalorder %s75, %s78
      %p87 = scmp.eq.s32.totalorder %s28, 5
      %p88 = por %p86, %p87
      %p89 = scmp.ne.s32.totalorder %s78, %s79
      %p90 = scmp.eq.s32.totalorder %s28, 0
      %p91 = por %p89, %p90
      %p92 = scmp.ne.s32.totalorder %s78, %s79
      %p93 = scmp.eq.s32.totalorder %s29, 5
      %p94 = por %p92, %p93
      %p96 = scmp.ne.s32.totalorder %s79, %s95
      %p97 = scmp.eq.s32.totalorder %s29, 0
      %p98 = por %p96, %p97
      %s99 = ssub.s32 %s30, %s42
      %p100 = scmp.eq.s32.totalorder %s99, 0
      %s102 = sadd.s32 %s101, 1
      %s103 = scalar_select %p100, %s101, %s102
      %p106 = pneg %p100
      %p107 = scmp.eq.s32.totalorder %s23, 5
      %p108 = por %p106, %p107
      %p109 = scmp.ne.s32.totalorder %s101, %s104
      %p110 = scmp.eq.s32.totalorder %s23, 0
      %p111 = por %p109, %p110
      %p112 = scmp.ne.s32.totalorder %s101, %s104
      %p113 = scmp.eq.s32.totalorder %s28, 5
      %p114 = por %p112, %p113
      %p115 = scmp.ne.s32.totalorder %s104, %s105
      %p116 = scmp.eq.s32.totalorder %s28, 0
      %p117 = por %p115, %p116
      %p118 = scmp.ne.s32.totalorder %s104, %s105
      %p119 = scmp.eq.s32.totalorder %s29, 5
      %p120 = por %p118, %p119
      %p122 = scmp.ne.s32.totalorder %s105, %s121
      %p123 = scmp.eq.s32.totalorder %s29, 0
      %p124 = por %p122, %p123
      %s125 = ssub.s32 %s30, %s42
      %p126 = scmp.eq.s32.totalorder %s125, 0
      %s128 = sadd.s32 %s127, 1
      %s129 = scalar_select %p126, %s127, %s128
      %p132 = pneg %p126
      %p133 = scmp.eq.s32.totalorder %s23, 5
      %p134 = por %p132, %p133
      %p135 = scmp.ne.s32.totalorder %s127, %s130
      %p136 = scmp.eq.s32.totalorder %s23, 0
      %p137 = por %p135, %p136
      %p138 = scmp.ne.s32.totalorder %s127, %s130
      %p139 = scmp.eq.s32.totalorder %s28, 5
      %p140 = por %p138, %p139
      %p141 = scmp.ne.s32.totalorder %s130, %s131
      %p142 = scmp.eq.s32.totalorder %s28, 0
      %p143 = por %p141, %p142
      %p144 = scmp.ne.s32.totalorder %s130, %s131
      %p145 = scmp.eq.s32.totalorder %s29, 5
      %p146 = por %p144, %p145
      %p148 = scmp.ne.s32.totalorder %s131, %s147
      %p149 = scmp.eq.s32.totalorder %s29, 0
      %p150 = por %p148, %p149
      %s151 = ssub.s32 %s30, %s42
      %p152 = scmp.eq.s32.totalorder %s151, 0
      %s154 = sadd.s32 %s153, 1
      %s155 = scalar_select %p152, %s153, %s154
      %p158 = pneg %p152
      %p159 = scmp.eq.s32.totalorder %s23, 5
      %p160 = por %p158, %p159
      %p161 = scmp.ne.s32.totalorder %s153, %s156
      %p162 = scmp.eq.s32.totalorder %s23, 0
      %p163 = por %p161, %p162
      %p164 = scmp.ne.s32.totalorder %s153, %s156
      %p165 = scmp.eq.s32.totalorder %s28, 5
      %p166 = por %p164, %p165
      %p167 = scmp.ne.s32.totalorder %s156, %s157
      %p168 = scmp.eq.s32.totalorder %s28, 0
      %p169 = por %p167, %p168
      %p170 = scmp.ne.s32.totalorder %s156, %s157
      %p171 = scmp.eq.s32.totalorder %s29, 5
      %p172 = por %p170, %p171
      %p174 = scmp.ne.s32.totalorder %s157, %s173
      %p175 = scmp.eq.s32.totalorder %s29, 0
      %p176 = por %p174, %p175
      %p177 = scmp.le.s32.totalorder 1, %s23
      %p178 = scmp.lt.s32.totalorder %s23, 7
      %p179 = pnand %p177, %p178
      %p180 = pneg %p179
      // Predicated region
      $region9: #{tpu_custom_call.1} parent=5 // pred_check
        _
      $region10: #{tpu_custom_call.1} parent=5 // pred_check_branch
        %182 = sbr.rel (%p179) target = $region12
      $region11: #{tpu_custom_call.1} parent=5 // pred_region
        %s183 = ssub.s32 %s23, 1
      $region12: #{tpu_custom_call.1} parent=5 // pred_fallthru
        _
      %p184 = scmp.lt.s32.totalorder %s23, 6
      // Predicated region
      $region13: #{tpu_custom_call.1} parent=5 // pred_check
        %p185 = pneg %p184
      $region14: #{tpu_custom_call.1} parent=5 // pred_check_branch
        %187 = sbr.rel (%p185) target = $region16
      $region15: #{tpu_custom_call.1} parent=5 // pred_region
        // Predicated region
        $region17: #{tpu_custom_call.1} parent=15 // pred_check
          %p188 = pneg %p59
        $region18: #{tpu_custom_call.1} parent=15 // pred_check_branch
          %190 = sbr.rel (%p188) target = $region20
        $region19: #{tpu_custom_call.1} parent=15 // pred_region
          %s191 = sand.u32 %s49, 1
          %s192 = scalar_lea.sflag [#allocation6], %s191
          %s193 = sand.u32 %s49, 1
          %s194 = smul.addr %s193, 64
          %s195 = scalar_lea.vmem [#allocation5], %s194
          %s196 = smul.u32 %s30, 2
          %s197 = sadd.s32 %s196, %s31
          %s198 = smul.u32 8, %s197
          %s200 = ssub.s32 1024, 1024
          %201 = vsyncadd %s192, %s200
          %s202 = smul.addr %s198, 128
          %s203 = scalar_lea.hbm %s0, %s202
          %s204 = sshll.u32 %s195, 4
          %s205 = int_to_ptr.vmem [resolvable:$true] %s204
          %210 = dma.hbm_to_vmem [thread:$0]  %s203, 1024, %s205, %s192, 128, 128, 8
        $region20: #{tpu_custom_call.1} parent=15 // pred_fallthru
          _
        // Predicated region
        $region21: #{tpu_custom_call.1} parent=15 // pred_check
          %p211 = pneg %p85
        $region22: #{tpu_custom_call.1} parent=15 // pred_check_branch
          %213 = sbr.rel (%p211) target = $region24
        $region23: #{tpu_custom_call.1} parent=15 // pred_region
          %s214 = sand.u32 %s75, 1
          %s215 = scalar_lea.sflag [#allocation9], %s214
          %s216 = sand.u32 %s75, 1
          %s217 = scalar_lea.vmem [#allocation8], %s216
          %s219 = ssub.s32 16, 16
          %220 = vsyncadd %s215, %s219
          %s221 = smul.addr %s30, 16
          %s222 = scalar_lea.hbm %s1, %s221
          %s224 = sshll.u32 %s217, 4
          %s225 = int_to_ptr.vmem [resolvable:$true] %s224
          %227 = dma.hbm_to_vmem [thread:$0]  %s222, 16, %s225, %s215
        $region24: #{tpu_custom_call.1} parent=15 // pred_fallthru
          _
      $region16: #{tpu_custom_call.1} parent=5 // pred_fallthru
        _
      %p228 = scmp.le.s32.totalorder 1, %s23
      %p229 = scmp.lt.s32.totalorder %s23, 7
      %p230 = pnand %p228, %p229
      %p231 = pneg %p230
      // Predicated region
      $region25: #{tpu_custom_call.1} parent=5 // pred_check
        _
      $region26: #{tpu_custom_call.1} parent=5 // pred_check_branch
        %233 = sbr.rel (%p230) target = $region28
      $region27: #{tpu_custom_call.1} parent=5 // pred_region
        %s234 = ssub.s32 %s23, 1
        %s235 = sand.u32 %s52, 1
        %s236 = scalar_lea.sflag [#allocation6], %s235
        %s237 = sand.u32 %s52, 1
        %s238 = smul.addr %s237, 64
        %s239 = scalar_lea.vmem [#allocation5], %s238
        // Predicated region
        $region29: #{tpu_custom_call.1} parent=27 // pred_check
          %p240 = pneg %p65
        $region30: #{tpu_custom_call.1} parent=27 // pred_check_branch
          %242 = sbr.rel (%p240) target = $region32
        $region31: #{tpu_custom_call.1} parent=27 // pred_region
          %243 = dma.done %s236, 1024
        $region32: #{tpu_custom_call.1} parent=27 // pred_fallthru
          _
        %s244 = sand.u32 %s78, 1
        %s245 = scalar_lea.sflag [#allocation9], %s244
        %s246 = sand.u32 %s78, 1
        %s247 = scalar_lea.vmem [#allocation8], %s246
        // Predicated region
        $region33: #{tpu_custom_call.1} parent=27 // pred_check
          %p248 = pneg %p91
        $region34: #{tpu_custom_call.1} parent=27 // pred_check_branch
          %250 = sbr.rel (%p248) target = $region36
        $region35: #{tpu_custom_call.1} parent=27 // pred_region
          %251 = dma.done %s245, 16
        $region36: #{tpu_custom_call.1} parent=27 // pred_fallthru
          _
        %s252 = sand.u32 %s52, 1
        %s253 = scalar_lea.sflag [#allocation6], %s252
        %s254 = sand.u32 %s52, 1
        %s255 = smul.addr %s254, 64
        %s256 = scalar_lea.vmem [#allocation5], %s255
        %p257 = pneg %p65
        %p258 = pneg %p62
        %s259 = sand.u32 %s78, 1
        %s260 = scalar_lea.sflag [#allocation9], %s259
        %s261 = sand.u32 %s78, 1
        %s262 = scalar_lea.vmem [#allocation8], %s261
        %p263 = pneg %p91
        %p264 = pneg %p88
        %p265 = pneg %p117
        %p266 = pneg %p114
        %s267 = sand.u32 %s104, 1
        %s268 = scalar_lea.sflag [#allocation7], %s267
        %s269 = sand.u32 %s104, 1
        %s270 = smul.addr %s269, 2
        %s271 = scalar_lea.vmem [#allocation10], %s270
        %p272 = pneg %p143
        %p273 = pneg %p140
        %s274 = sand.u32 %s28, 1
        %s275 = scalar_lea.sflag [#allocation12], %s274
        %s276 = sand.u32 %s130, 1
        %s277 = scalar_lea.vmem [#allocation11], %s276
        %p278 = pneg %p169
        %p279 = pneg %p166
        %s280 = sand.u32 %s28, 1
        %s281 = scalar_lea.sflag [#allocation12], %s280
        %s282 = sand.u32 %s156, 1
        %s283 = scalar_lea.vmem [#allocation13], %s282
        %s284 = smul.u32 %s32, 2
        %s285 = sadd.s32 %s284, %s33
        %s286 = smul.u32 8, %s285
        %p287 = scmp.eq.s32.totalorder %s33, 0
        // Predicated region
        $region37: #{tpu_custom_call.1} parent=27 // pred_check
          %p288 = pneg %p287
        $region38: #{tpu_custom_call.1} parent=27 // pred_check_branch
          %290 = sbr.rel (%p288) target = $region40
        $region39: #{tpu_custom_call.1} parent=27 // pred_region
          %291 = vst [vmem:[#allocation3] sm:$0x1] 0.0
          %vm292 = vcmask 0
          %293 = vst.msk [vmem:[#allocation4] sm:$0x1] %vm292, 0.0
        $region40: #{tpu_custom_call.1} parent=27 // pred_fallthru
          _
        %v294 = vld [vmem:[%s239] sm:$0xff]
        %v295 = vld [vmem:[%s239 + $0x8] sm:$0xff]
        %v296 = vld [vmem:[%s239 + $0x10] sm:$0xff]
        %v297 = vld [vmem:[%s239 + $0x18] sm:$0xff]
        %v298 = vld [vmem:[%s239 + $0x20] sm:$0xff]
        %v299 = vld [vmem:[%s239 + $0x28] sm:$0xff]
        %v300 = vld [vmem:[%s239 + $0x30] sm:$0xff]
        %v301 = vld [vmem:[%s239 + $0x38] sm:$0xff]
        %v302 = vld [vmem:[%s247] sm:$0x1]
        %303 = vmatprep.subr.mxu0 0.0
        %v304 = vand.u32 %v294, 4294901760
        %305 = vmatpush1.xpose.msra.mxu0 %v304
        %306 = vmatprep.subr.mxu0 0.0
        %v307 = vand.u32 %v295, 4294901760
        %308 = vmatpush1.xpose.msra.mxu0 %v307
        %309 = vmatprep.subr.mxu0 0.0
        %v310 = vand.u32 %v296, 4294901760
        %311 = vmatpush1.xpose.msra.mxu0 %v310
        %312 = vmatprep.subr.mxu0 0.0
        %v313 = vand.u32 %v297, 4294901760
        %314 = vmatpush1.xpose.msra.mxu0 %v313
        %315 = vmatprep.subr.mxu0 0.0
        %v316 = vand.u32 %v298, 4294901760
        %317 = vmatpush1.xpose.msra.mxu0 %v316
        %318 = vmatprep.subr.mxu0 0.0
        %v319 = vand.u32 %v299, 4294901760
        %320 = vmatpush1.xpose.msra.mxu0 %v319
        %321 = vmatprep.subr.mxu0 0.0
        %v322 = vand.u32 %v300, 4294901760
        %323 = vmatpush1.xpose.msra.mxu0 %v322
        %324 = vmatprep.subr.mxu0 0.0
        %v325 = vand.u32 %v301, 4294901760
        %326 = vmatpush1.xpose.msra.mxu0 %v325
        %327 = vmatprep.subr.mxu0 0.0
        %328 = vmatpush1.xpose.msra.mxu0 0.0
        %329 = vmatprep.subr.mxu0 0.0
        %330 = vmatpush1.xpose.msra.mxu0 0.0
        %331 = vmatprep.subr.mxu0 0.0
        %332 = vmatpush1.xpose.msra.mxu0 0.0
        %333 = vmatprep.subr.mxu0 0.0
        %334 = vmatpush1.xpose.msra.mxu0 0.0
        %335 = vmatprep.subr.mxu0 0.0
        %336 = vmatpush1.xpose.msra.mxu0 0.0
        %337 = vmatprep.subr.mxu0 0.0
        %338 = vmatpush1.xpose.msra.mxu0 0.0
        %339 = vmatprep.subr.mxu0 0.0
        %340 = vmatpush1.xpose.msra.mxu0 0.0
        %341 = vmatprep.subr.mxu0 0.0
        %342 = vmatpush1.xpose.msra.mxu0 0.0
        %343 = vmatprep.subr.mxu0 0.0
        %344 = vmatpush1.xpose.msra.mxu0 0.0
        %345 = vmatprep.subr.mxu0 0.0
        %346 = vmatpush1.xpose.msra.mxu0 0.0
        %347 = vmatprep.subr.mxu0 0.0
        %348 = vmatpush1.xpose.msra.mxu0 0.0
        %349 = vmatprep.subr.mxu0 0.0
        %350 = vmatpush1.xpose.msra.mxu0 0.0
        %351 = vmatprep.subr.mxu0 0.0
        %352 = vmatpush1.xpose.msra.mxu0 0.0
        %353 = vmatprep.subr.mxu0 0.0
        %354 = vmatpush1.xpose.msra.mxu0 0.0
        %355 = vmatprep.subr.mxu0 0.0
        %356 = vmatpush1.xpose.msra.mxu0 0.0
        %357 = vmatprep.subr.mxu0 0.0
        %358 = vmatpush1.xpose.msra.mxu0 0.0
        %359 = vmatprep.subr.mxu0 0.0
        %360 = vmatpush1.xpose.msra.mxu0 0.0
        %361 = vmatprep.subr.mxu0 0.0
        %362 = vmatpush1.xpose.msra.mxu0 0.0
        %363 = vmatprep.subr.mxu0 0.0
        %364 = vmatpush1.xpose.msra.mxu0 0.0
        %365 = vmatprep.subr.mxu0 0.0
        %366 = vmatpush1.xpose.msra.mxu0 0.0
        %367 = vmatprep.subr.mxu0 0.0
        %368 = vmatpush1.xpose.msra.mxu0 0.0
        %369 = vmatprep.subr.mxu0 0.0
        %370 = vmatpush1.xpose.msra.mxu0 0.0
        %371 = vmatprep.subr.mxu0 0.0
        %372 = vmatpush1.xpose.msra.mxu0 0.0
        %373 = vmatprep.subr.mxu0 0.0
        %374 = vmatpush1.xpose.msra.mxu0 0.0
        %375 = vmatprep.mubr.f32.mxu0 0.0
        %v376 = vand.u32 %v302, 4294901760
        %v377 = vsub.f32 %v302, %v376
        %v378 = vand.u32 %v377, 4294901760
        %v379 = vsub.f32 %v377, %v378
        %v380 = vand.u32 %v379, 4294901760
        %381 = vmatmul.mubr.f32.gmra.mrb[0].mxu0 %v380
        %v382 = vpop.f32.mrb[0].mxu0
        %v383 = vadd.f32 0.0, %v382
        %v384 = vpop.f32.mrb[0].mxu0
        %385 = vdwg.mxu0
        %386 = vmatprep.subr.mxu0 0.0
        %v387 = vand.u32 %v294, 4294901760
        %v388 = vsub.f32 %v294, %v387
        %v389 = vand.u32 %v388, 4294901760
        %v390 = vsub.f32 %v388, %v389
        %v391 = vand.u32 %v390, 4294901760
        %392 = vmatpush1.xpose.msra.mxu0 %v391
        %393 = vmatprep.subr.mxu0 0.0
        %v394 = vand.u32 %v295, 4294901760
        %v395 = vsub.f32 %v295, %v394
        %v396 = vand.u32 %v395, 4294901760
        %v397 = vsub.f32 %v395, %v396
        %v398 = vand.u32 %v397, 4294901760
        %399 = vmatpush1.xpose.msra.mxu0 %v398
        %400 = vmatprep.subr.mxu0 0.0
        %v401 = vand.u32 %v296, 4294901760
        %v402 = vsub.f32 %v296, %v401
        %v403 = vand.u32 %v402, 4294901760
        %v404 = vsub.f32 %v402, %v403
        %v405 = vand.u32 %v404, 4294901760
        %406 = vmatpush1.xpose.msra.mxu0 %v405
        %407 = vmatprep.subr.mxu0 0.0
        %v408 = vand.u32 %v297, 4294901760
        %v409 = vsub.f32 %v297, %v408
        %v410 = vand.u32 %v409, 4294901760
        %v411 = vsub.f32 %v409, %v410
        %v412 = vand.u32 %v411, 4294901760
        %413 = vmatpush1.xpose.msra.mxu0 %v412
        %414 = vmatprep.subr.mxu0 0.0
        %v415 = vand.u32 %v298, 4294901760
        %v416 = vsub.f32 %v298, %v415
        %v417 = vand.u32 %v416, 4294901760
        %v418 = vsub.f32 %v416, %v417
        %v419 = vand.u32 %v418, 4294901760
        %420 = vmatpush1.xpose.msra.mxu0 %v419
        %421 = vmatprep.subr.mxu0 0.0
        %v422 = vand.u32 %v299, 4294901760
        %v423 = vsub.f32 %v299, %v422
        %v424 = vand.u32 %v423, 4294901760
        %v425 = vsub.f32 %v423, %v424
        %v426 = vand.u32 %v425, 4294901760
        %427 = vmatpush1.xpose.msra.mxu0 %v426
        %428 = vmatprep.subr.mxu0 0.0
        %v429 = vand.u32 %v300, 4294901760
        %v430 = vsub.f32 %v300, %v429
        %v431 = vand.u32 %v430, 4294901760
        %v432 = vsub.f32 %v430, %v431
        %v433 = vand.u32 %v432, 4294901760
        %434 = vmatpush1.xpose.msra.mxu0 %v433
        %435 = vmatprep.subr.mxu0 0.0
        %v436 = vand.u32 %v301, 4294901760
        %v437 = vsub.f32 %v301, %v436
        %v438 = vand.u32 %v437, 4294901760
        %v439 = vsub.f32 %v437, %v438
        %v440 = vand.u32 %v439, 4294901760
        %441 = vmatpush1.xpose.msra.mxu0 %v440
        %442 = vmatprep.subr.mxu0 0.0
        %443 = vmatpush1.xpose.msra.mxu0 0.0
        %444 = vmatprep.subr.mxu0 0.0
        %445 = vmatpush1.xpose.msra.mxu0 0.0
        %446 = vmatprep.subr.mxu0 0.0
        %447 = vmatpush1.xpose.msra.mxu0 0.0
        %448 = vmatprep.subr.mxu0 0.0
        %449 = vmatpush1.xpose.msra.mxu0 0.0
        %450 = vmatprep.subr.mxu0 0.0
        %451 = vmatpush1.xpose.msra.mxu0 0.0
        %452 = vmatprep.subr.mxu0 0.0
        %453 = vmatpush1.xpose.msra.mxu0 0.0
        %454 = vmatprep.subr.mxu0 0.0
        %455 = vmatpush1.xpose.msra.mxu0 0.0
        %456 = vmatprep.subr.mxu0 0.0
        %457 = vmatpush1.xpose.msra.mxu0 0.0
        %458 = vmatprep.subr.mxu0 0.0
        %459 = vmatpush1.xpose.msra.mxu0 0.0
        %460 = vmatprep.subr.mxu0 0.0
        %461 = vmatpush1.xpose.msra.mxu0 0.0
        %462 = vmatprep.subr.mxu0 0.0
        %463 = vmatpush1.xpose.msra.mxu0 0.0
        %464 = vmatprep.subr.mxu0 0.0
        %465 = vmatpush1.xpose.msra.mxu0 0.0
        %466 = vmatprep.subr.mxu0 0.0
        %467 = vmatpush1.xpose.msra.mxu0 0.0
        %468 = vmatprep.subr.mxu0 0.0
        %469 = vmatpush1.xpose.msra.mxu0 0.0
        %470 = vmatprep.subr.mxu0 0.0
        %471 = vmatpush1.xpose.msra.mxu0 0.0
        %472 = vmatprep.subr.mxu0 0.0
        %473 = vmatpush1.xpose.msra.mxu0 0.0
        %474 = vmatprep.subr.mxu0 0.0
        %475 = vmatpush1.xpose.msra.mxu0 0.0
        %476 = vmatprep.subr.mxu0 0.0
        %477 = vmatpush1.xpose.msra.mxu0 0.0
        %478 = vmatprep.subr.mxu0 0.0
        %479 = vmatpush1.xpose.msra.mxu0 0.0
        %480 = vmatprep.subr.mxu0 0.0
        %481 = vmatpush1.xpose.msra.mxu0 0.0
        %482 = vmatprep.subr.mxu0 0.0
        %483 = vmatpush1.xpose.msra.mxu0 0.0
        %484 = vmatprep.subr.mxu0 0.0
        %485 = vmatpush1.xpose.msra.mxu0 0.0
        %486 = vmatprep.subr.mxu0 0.0
        %487 = vmatpush1.xpose.msra.mxu0 0.0
        %488 = vmatprep.subr.mxu0 0.0
        %489 = vmatpush1.xpose.msra.mxu0 0.0
        %490 = vmatprep.mubr.f32.mxu0 0.0
        %v491 = vand.u32 %v302, 4294901760
        %492 = vmatmul.mubr.f32.gmra.mrb[0].mxu0 %v491
        %v493 = vpop.f32.mrb[0].mxu0
        %v494 = vadd.f32 %v383, %v493
        %v495 = vpop.f32.mrb[0].mxu0
        %496 = vdwg.mxu0
        %497 = vmatprep.subr.mxu0 0.0
        %v498 = vand.u32 %v294, 4294901760
        %v499 = vsub.f32 %v294, %v498
        %500 = vmatpush1.xpose.msra.mxu0 %v499
        %501 = vmatprep.subr.mxu0 0.0
        %v502 = vand.u32 %v295, 4294901760
        %v503 = vsub.f32 %v295, %v502
        %504 = vmatpush1.xpose.msra.mxu0 %v503
        %505 = vmatprep.subr.mxu0 0.0
        %v506 = vand.u32 %v296, 4294901760
        %v507 = vsub.f32 %v296, %v506
        %508 = vmatpush1.xpose.msra.mxu0 %v507
        %509 = vmatprep.subr.mxu0 0.0
        %v510 = vand.u32 %v297, 4294901760
        %v511 = vsub.f32 %v297, %v510
        %512 = vmatpush1.xpose.msra.mxu0 %v511
        %513 = vmatprep.subr.mxu0 0.0
        %v514 = vand.u32 %v298, 4294901760
        %v515 = vsub.f32 %v298, %v514
        %516 = vmatpush1.xpose.msra.mxu0 %v515
        %517 = vmatprep.subr.mxu0 0.0
        %v518 = vand.u32 %v299, 4294901760
        %v519 = vsub.f32 %v299, %v518
        %520 = vmatpush1.xpose.msra.mxu0 %v519
        %521 = vmatprep.subr.mxu0 0.0
        %v522 = vand.u32 %v300, 4294901760
        %v523 = vsub.f32 %v300, %v522
        %524 = vmatpush1.xpose.msra.mxu0 %v523
        %525 = vmatprep.subr.mxu0 0.0
        %v526 = vand.u32 %v301, 4294901760
        %v527 = vsub.f32 %v301, %v526
        %528 = vmatpush1.xpose.msra.mxu0 %v527
        %529 = vmatprep.subr.mxu0 0.0
        %530 = vmatpush1.xpose.msra.mxu0 0.0
        %531 = vmatprep.subr.mxu0 0.0
        %532 = vmatpush1.xpose.msra.mxu0 0.0
        %533 = vmatprep.subr.mxu0 0.0
        %534 = vmatpush1.xpose.msra.mxu0 0.0
        %535 = vmatprep.subr.mxu0 0.0
        %536 = vmatpush1.xpose.msra.mxu0 0.0
        %537 = vmatprep.subr.mxu0 0.0
        %538 = vmatpush1.xpose.msra.mxu0 0.0
        %539 = vmatprep.subr.mxu0 0.0
        %540 = vmatpush1.xpose.msra.mxu0 0.0
        %541 = vmatprep.subr.mxu0 0.0
        %542 = vmatpush1.xpose.msra.mxu0 0.0
        %543 = vmatprep.subr.mxu0 0.0
        %544 = vmatpush1.xpose.msra.mxu0 0.0
        %545 = vmatprep.subr.mxu0 0.0
        %546 = vmatpush1.xpose.msra.mxu0 0.0
        %547 = vmatprep.subr.mxu0 0.0
        %548 = vmatpush1.xpose.msra.mxu0 0.0
        %549 = vmatprep.subr.mxu0 0.0
        %550 = vmatpush1.xpose.msra.mxu0 0.0
        %551 = vmatprep.subr.mxu0 0.0
        %552 = vmatpush1.xpose.msra.mxu0 0.0
        %553 = vmatprep.subr.mxu0 0.0
        %554 = vmatpush1.xpose.msra.mxu0 0.0
        %555 = vmatprep.subr.mxu0 0.0
        %556 = vmatpush1.xpose.msra.mxu0 0.0
        %557 = vmatprep.subr.mxu0 0.0
        %558 = vmatpush1.xpose.msra.mxu0 0.0
        %559 = vmatprep.subr.mxu0 0.0
        %560 = vmatpush1.xpose.msra.mxu0 0.0
        %561 = vmatprep.subr.mxu0 0.0
        %562 = vmatpush1.xpose.msra.mxu0 0.0
        %563 = vmatprep.subr.mxu0 0.0
        %564 = vmatpush1.xpose.msra.mxu0 0.0
        %565 = vmatprep.subr.mxu0 0.0
        %566 = vmatpush1.xpose.msra.mxu0 0.0
        %567 = vmatprep.subr.mxu0 0.0
        %568 = vmatpush1.xpose.msra.mxu0 0.0
        %569 = vmatprep.subr.mxu0 0.0
        %570 = vmatpush1.xpose.msra.mxu0 0.0
        %571 = vmatprep.subr.mxu0 0.0
        %572 = vmatpush1.xpose.msra.mxu0 0.0
        %573 = vmatprep.subr.mxu0 0.0
        %574 = vmatpush1.xpose.msra.mxu0 0.0
        %575 = vmatprep.subr.mxu0 0.0
        %576 = vmatpush1.xpose.msra.mxu0 0.0
        %577 = vmatprep.mubr.f32.mxu0 0.0
        %v578 = vand.u32 %v302, 4294901760
        %v579 = vsub.f32 %v302, %v578
        %580 = vmatmul.mubr.f32.gmra.mrb[0].mxu0 %v579
        %v581 = vpop.f32.mrb[0].mxu0
        %v582 = vadd.f32 %v494, %v581
        %v583 = vpop.f32.mrb[0].mxu0
        %584 = vdwg.mxu0
        %585 = vmatprep.subr.mxu0 0.0
        %v586 = vand.u32 %v294, 4294901760
        %587 = vmatpush1.xpose.msra.mxu0 %v586
        %588 = vmatprep.subr.mxu0 0.0
        %v589 = vand.u32 %v295, 4294901760
        %590 = vmatpush1.xpose.msra.mxu0 %v589
        %591 = vmatprep.subr.mxu0 0.0
        %v592 = vand.u32 %v296, 4294901760
        %593 = vmatpush1.xpose.msra.mxu0 %v592
        %594 = vmatprep.subr.mxu0 0.0
        %v595 = vand.u32 %v297, 4294901760
        %596 = vmatpush1.xpose.msra.mxu0 %v595
        %597 = vmatprep.subr.mxu0 0.0
        %v598 = vand.u32 %v298, 4294901760
        %599 = vmatpush1.xpose.msra.mxu0 %v598
        %600 = vmatprep.subr.mxu0 0.0
        %v601 = vand.u32 %v299, 4294901760
        %602 = vmatpush1.xpose.msra.mxu0 %v601
        %603 = vmatprep.subr.mxu0 0.0
        %v604 = vand.u32 %v300, 4294901760
        %605 = vmatpush1.xpose.msra.mxu0 %v604
        %606 = vmatprep.subr.mxu0 0.0
        %v607 = vand.u32 %v301, 4294901760
        %608 = vmatpush1.xpose.msra.mxu0 %v607
        %609 = vmatprep.subr.mxu0 0.0
        %610 = vmatpush1.xpose.msra.mxu0 0.0
        %611 = vmatprep.subr.mxu0 0.0
        %612 = vmatpush1.xpose.msra.mxu0 0.0
        %613 = vmatprep.subr.mxu0 0.0
        %614 = vmatpush1.xpose.msra.mxu0 0.0
        %615 = vmatprep.subr.mxu0 0.0
        %616 = vmatpush1.xpose.msra.mxu0 0.0
        %617 = vmatprep.subr.mxu0 0.0
        %618 = vmatpush1.xpose.msra.mxu0 0.0
        %619 = vmatprep.subr.mxu0 0.0
        %620 = vmatpush1.xpose.msra.mxu0 0.0
        %621 = vmatprep.subr.mxu0 0.0
        %622 = vmatpush1.xpose.msra.mxu0 0.0
        %623 = vmatprep.subr.mxu0 0.0
        %624 = vmatpush1.xpose.msra.mxu0 0.0
        %625 = vmatprep.subr.mxu0 0.0
        %626 = vmatpush1.xpose.msra.mxu0 0.0
        %627 = vmatprep.subr.mxu0 0.0
        %628 = vmatpush1.xpose.msra.mxu0 0.0
        %629 = vmatprep.subr.mxu0 0.0
        %630 = vmatpush1.xpose.msra.mxu0 0.0
        %631 = vmatprep.subr.mxu0 0.0
        %632 = vmatpush1.xpose.msra.mxu0 0.0
        %633 = vmatprep.subr.mxu0 0.0
        %634 = vmatpush1.xpose.msra.mxu0 0.0
        %635 = vmatprep.subr.mxu0 0.0
        %636 = vmatpush1.xpose.msra.mxu0 0.0
        %637 = vmatprep.subr.mxu0 0.0
        %638 = vmatpush1.xpose.msra.mxu0 0.0
        %639 = vmatprep.subr.mxu0 0.0
        %640 = vmatpush1.xpose.msra.mxu0 0.0
        %641 = vmatprep.subr.mxu0 0.0
        %642 = vmatpush1.xpose.msra.mxu0 0.0
        %643 = vmatprep.subr.mxu0 0.0
        %644 = vmatpush1.xpose.msra.mxu0 0.0
        %645 = vmatprep.subr.mxu0 0.0
        %646 = vmatpush1.xpose.msra.mxu0 0.0
        %647 = vmatprep.subr.mxu0 0.0
        %648 = vmatpush1.xpose.msra.mxu0 0.0
        %649 = vmatprep.subr.mxu0 0.0
        %650 = vmatpush1.xpose.msra.mxu0 0.0
        %651 = vmatprep.subr.mxu0 0.0
        %652 = vmatpush1.xpose.msra.mxu0 0.0
        %653 = vmatprep.subr.mxu0 0.0
        %654 = vmatpush1.xpose.msra.mxu0 0.0
        %655 = vmatprep.subr.mxu0 0.0
        %656 = vmatpush1.xpose.msra.mxu0 0.0
        %657 = vmatprep.mubr.f32.mxu0 0.0
        %v658 = vand.u32 %v302, 4294901760
        %v659 = vsub.f32 %v302, %v658
        %v660 = vand.u32 %v659, 4294901760
        %661 = vmatmul.mubr.f32.gmra.mrb[0].mxu0 %v660
        %v662 = vpop.f32.mrb[0].mxu0
        %v663 = vadd.f32 %v582, %v662
        %v664 = vpop.f32.mrb[0].mxu0
        %665 = vdwg.mxu0
        %666 = vmatprep.subr.mxu0 0.0
        %v667 = vand.u32 %v294, 4294901760
        %v668 = vsub.f32 %v294, %v667
        %v669 = vand.u32 %v668, 4294901760
        %670 = vmatpush1.xpose.msra.mxu0 %v669
        %671 = vmatprep.subr.mxu0 0.0
        %v672 = vand.u32 %v295, 4294901760
        %v673 = vsub.f32 %v295, %v672
        %v674 = vand.u32 %v673, 4294901760
        %675 = vmatpush1.xpose.msra.mxu0 %v674
        %676 = vmatprep.subr.mxu0 0.0
        %v677 = vand.u32 %v296, 4294901760
        %v678 = vsub.f32 %v296, %v677
        %v679 = vand.u32 %v678, 4294901760
        %680 = vmatpush1.xpose.msra.mxu0 %v679
        %681 = vmatprep.subr.mxu0 0.0
        %v682 = vand.u32 %v297, 4294901760
        %v683 = vsub.f32 %v297, %v682
        %v684 = vand.u32 %v683, 4294901760
        %685 = vmatpush1.xpose.msra.mxu0 %v684
        %686 = vmatprep.subr.mxu0 0.0
        %v687 = vand.u32 %v298, 4294901760
        %v688 = vsub.f32 %v298, %v687
        %v689 = vand.u32 %v688, 4294901760
        %690 = vmatpush1.xpose.msra.mxu0 %v689
        %691 = vmatprep.subr.mxu0 0.0
        %v692 = vand.u32 %v299, 4294901760
        %v693 = vsub.f32 %v299, %v692
        %v694 = vand.u32 %v693, 4294901760
        %695 = vmatpush1.xpose.msra.mxu0 %v694
        %696 = vmatprep.subr.mxu0 0.0
        %v697 = vand.u32 %v300, 4294901760
        %v698 = vsub.f32 %v300, %v697
        %v699 = vand.u32 %v698, 4294901760
        %700 = vmatpush1.xpose.msra.mxu0 %v699
        %701 = vmatprep.subr.mxu0 0.0
        %v702 = vand.u32 %v301, 4294901760
        %v703 = vsub.f32 %v301, %v702
        %v704 = vand.u32 %v703, 4294901760
        %705 = vmatpush1.xpose.msra.mxu0 %v704
        %706 = vmatprep.subr.mxu0 0.0
        %707 = vmatpush1.xpose.msra.mxu0 0.0
        %708 = vmatprep.subr.mxu0 0.0
        %709 = vmatpush1.xpose.msra.mxu0 0.0
        %710 = vmatprep.subr.mxu0 0.0
        %711 = vmatpush1.xpose.msra.mxu0 0.0
        %712 = vmatprep.subr.mxu0 0.0
        %713 = vmatpush1.xpose.msra.mxu0 0.0
        %714 = vmatprep.subr.mxu0 0.0
        %715 = vmatpush1.xpose.msra.mxu0 0.0
        %716 = vmatprep.subr.mxu0 0.0
        %717 = vmatpush1.xpose.msra.mxu0 0.0
        %718 = vmatprep.subr.mxu0 0.0
        %719 = vmatpush1.xpose.msra.mxu0 0.0
        %720 = vmatprep.subr.mxu0 0.0
        %721 = vmatpush1.xpose.msra.mxu0 0.0
        %722 = vmatprep.subr.mxu0 0.0
        %723 = vmatpush1.xpose.msra.mxu0 0.0
        %724 = vmatprep.subr.mxu0 0.0
        %725 = vmatpush1.xpose.msra.mxu0 0.0
        %726 = vmatprep.subr.mxu0 0.0
        %727 = vmatpush1.xpose.msra.mxu0 0.0
        %728 = vmatprep.subr.mxu0 0.0
        %729 = vmatpush1.xpose.msra.mxu0 0.0
        %730 = vmatprep.subr.mxu0 0.0
        %731 = vmatpush1.xpose.msra.mxu0 0.0
        %732 = vmatprep.subr.mxu0 0.0
        %733 = vmatpush1.xpose.msra.mxu0 0.0
        %734 = vmatprep.subr.mxu0 0.0
        %735 = vmatpush1.xpose.msra.mxu0 0.0
        %736 = vmatprep.subr.mxu0 0.0
        %737 = vmatpush1.xpose.msra.mxu0 0.0
        %738 = vmatprep.subr.mxu0 0.0
        %739 = vmatpush1.xpose.msra.mxu0 0.0
        %740 = vmatprep.subr.mxu0 0.0
        %741 = vmatpush1.xpose.msra.mxu0 0.0
        %742 = vmatprep.subr.mxu0 0.0
        %743 = vmatpush1.xpose.msra.mxu0 0.0
        %744 = vmatprep.subr.mxu0 0.0
        %745 = vmatpush1.xpose.msra.mxu0 0.0
        %746 = vmatprep.subr.mxu0 0.0
        %747 = vmatpush1.xpose.msra.mxu0 0.0
        %748 = vmatprep.subr.mxu0 0.0
        %749 = vmatpush1.xpose.msra.mxu0 0.0
        %750 = vmatprep.subr.mxu0 0.0
        %751 = vmatpush1.xpose.msra.mxu0 0.0
        %752 = vmatprep.subr.mxu0 0.0
        %753 = vmatpush1.xpose.msra.mxu0 0.0
        %754 = vmatprep.mubr.f32.mxu0 0.0
        %v755 = vand.u32 %v302, 4294901760
        %756 = vmatmul.mubr.f32.gmra.mrb[0].mxu0 %v755
        %v757 = vpop.f32.mrb[0].mxu0
        %v758 = vadd.f32 %v663, %v757
        %v759 = vpop.f32.mrb[0].mxu0
        %760 = vdwg.mxu0
        %761 = vmatprep.subr.mxu0 0.0
        %v762 = vand.u32 %v294, 4294901760
        %763 = vmatpush1.xpose.msra.mxu0 %v762
        %764 = vmatprep.subr.mxu0 0.0
        %v765 = vand.u32 %v295, 4294901760
        %766 = vmatpush1.xpose.msra.mxu0 %v765
        %767 = vmatprep.subr.mxu0 0.0
        %v768 = vand.u32 %v296, 4294901760
        %769 = vmatpush1.xpose.msra.mxu0 %v768
        %770 = vmatprep.subr.mxu0 0.0
        %v771 = vand.u32 %v297, 4294901760
        %772 = vmatpush1.xpose.msra.mxu0 %v771
        %773 = vmatprep.subr.mxu0 0.0
        %v774 = vand.u32 %v298, 4294901760
        %775 = vmatpush1.xpose.msra.mxu0 %v774
        %776 = vmatprep.subr.mxu0 0.0
        %v777 = vand.u32 %v299, 4294901760
        %778 = vmatpush1.xpose.msra.mxu0 %v777
        %779 = vmatprep.subr.mxu0 0.0
        %v780 = vand.u32 %v300, 4294901760
        %781 = vmatpush1.xpose.msra.mxu0 %v780
        %782 = vmatprep.subr.mxu0 0.0
        %v783 = vand.u32 %v301, 4294901760
        %784 = vmatpush1.xpose.msra.mxu0 %v783
        %785 = vmatprep.subr.mxu0 0.0
        %786 = vmatpush1.xpose.msra.mxu0 0.0
        %787 = vmatprep.subr.mxu0 0.0
        %788 = vmatpush1.xpose.msra.mxu0 0.0
        %789 = vmatprep.subr.mxu0 0.0
        %790 = vmatpush1.xpose.msra.mxu0 0.0
        %791 = vmatprep.subr.mxu0 0.0
        %792 = vmatpush1.xpose.msra.mxu0 0.0
        %793 = vmatprep.subr.mxu0 0.0
        %794 = vmatpush1.xpose.msra.mxu0 0.0
        %795 = vmatprep.subr.mxu0 0.0
        %796 = vmatpush1.xpose.msra.mxu0 0.0
        %797 = vmatprep.subr.mxu0 0.0
        %798 = vmatpush1.xpose.msra.mxu0 0.0
        %799 = vmatprep.subr.mxu0 0.0
        %800 = vmatpush1.xpose.msra.mxu0 0.0
        %801 = vmatprep.subr.mxu0 0.0
        %802 = vmatpush1.xpose.msra.mxu0 0.0
        %803 = vmatprep.subr.mxu0 0.0
        %804 = vmatpush1.xpose.msra.mxu0 0.0
        %805 = vmatprep.subr.mxu0 0.0
        %806 = vmatpush1.xpose.msra.mxu0 0.0
        %807 = vmatprep.subr.mxu0 0.0
        %808 = vmatpush1.xpose.msra.mxu0 0.0
        %809 = vmatprep.subr.mxu0 0.0
        %810 = vmatpush1.xpose.msra.mxu0 0.0
        %811 = vmatprep.subr.mxu0 0.0
        %812 = vmatpush1.xpose.msra.mxu0 0.0
        %813 = vmatprep.subr.mxu0 0.0
        %814 = vmatpush1.xpose.msra.mxu0 0.0
        %815 = vmatprep.subr.mxu0 0.0
        %816 = vmatpush1.xpose.msra.mxu0 0.0
        %817 = vmatprep.subr.mxu0 0.0
        %818 = vmatpush1.xpose.msra.mxu0 0.0
        %819 = vmatprep.subr.mxu0 0.0
        %820 = vmatpush1.xpose.msra.mxu0 0.0
        %821 = vmatprep.subr.mxu0 0.0
        %822 = vmatpush1.xpose.msra.mxu0 0.0
        %823 = vmatprep.subr.mxu0 0.0
        %824 = vmatpush1.xpose.msra.mxu0 0.0
        %825 = vmatprep.subr.mxu0 0.0
        %826 = vmatpush1.xpose.msra.mxu0 0.0
        %827 = vmatprep.subr.mxu0 0.0
        %828 = vmatpush1.xpose.msra.mxu0 0.0
        %829 = vmatprep.subr.mxu0 0.0
        %830 = vmatpush1.xpose.msra.mxu0 0.0
        %831 = vmatprep.subr.mxu0 0.0
        %832 = vmatpush1.xpose.msra.mxu0 0.0
        %833 = vmatprep.mubr.f32.mxu0 0.0
        %v834 = vand.u32 %v302, 4294901760
        %835 = vmatmul.mubr.f32.gmra.mrb[0].mxu0 %v834
        %v836 = vpop.f32.mrb[0].mxu0
        %v837 = vadd.f32 %v758, %v836
        %v838 = vpop.f32.mrb[0].mxu0
        %839 = vdwg.mxu0
        %s840 = scalar_lea.vmem [#allocation2], %s33
        %vm841 = vcmask 516096
        %842 = vst.msk [vmem:[%s840] sm:$0x1] %vm841, %v837
        %v843 = vld [vmem:[#allocation4] sm:$0x1]
        %v844 = vmul.f32 %v837, %v837
        %v845 = vsel %vm841, %v844, 0.0
        %846 = vadd.xlane.f32.xlu0 %v845
        %v847 = vpop.xlane.xlu0 %846
        %v848 = vrot.slane %v847, 4
        %v849 = vadd.f32 %v847, %v848
        %v850 = vrot.slane %v849, 2
        %v851 = vadd.f32 %v849, %v850
        %v852 = vrot.slane %v851, 1
        %v853 = vadd.f32 %v851, %v852
        %s854 = vtos %v853
        %v855 = vstv %s854
        %v856 = vadd.f32 %v843, %v855
        %vm857 = vcmask 0
        %858 = vst.msk [vmem:[#allocation4] sm:$0x1] %vm857, %v856
        %v859 = vld [vmem:[#allocation3] sm:$0x1]
        %vm860 = vcmask 523264
        %v862 = vsel %vm860, %v837, 0
        %864 = vmatprep.subr.mxu0 0.0
        %v865 = vand.u32 %v294, 4294901760
        %866 = vmatpush1.msra.mxu0 %v865
        %867 = vmatprep.subr.mxu0 0.0
        %v868 = vand.u32 %v295, 4294901760
        %869 = vmatpush1.msra.mxu0 %v868
        %870 = vmatprep.subr.mxu0 0.0
        %v871 = vand.u32 %v296, 4294901760
        %872 = vmatpush1.msra.mxu0 %v871
        %873 = vmatprep.subr.mxu0 0.0
        %v874 = vand.u32 %v297, 4294901760
        %875 = vmatpush1.msra.mxu0 %v874
        %876 = vmatprep.subr.mxu0 0.0
        %v877 = vand.u32 %v298, 4294901760
        %878 = vmatpush1.msra.mxu0 %v877
        %879 = vmatprep.subr.mxu0 0.0
        %v880 = vand.u32 %v299, 4294901760
        %881 = vmatpush1.msra.mxu0 %v880
        %882 = vmatprep.subr.mxu0 0.0
        %v883 = vand.u32 %v300, 4294901760
        %884 = vmatpush1.msra.mxu0 %v883
        %885 = vmatprep.subr.mxu0 0.0
        %v886 = vand.u32 %v301, 4294901760
        %887 = vmatpush1.msra.mxu0 %v886
        %888 = vmatprep.subr.mxu0 0.0
        %889 = vmatpush1.msra.mxu0 0.0
        %890 = vmatprep.subr.mxu0 0.0
        %891 = vmatpush1.msra.mxu0 0.0
        %892 = vmatprep.subr.mxu0 0.0
        %893 = vmatpush1.msra.mxu0 0.0
        %894 = vmatprep.subr.mxu0 0.0
        %895 = vmatpush1.msra.mxu0 0.0
        %896 = vmatprep.subr.mxu0 0.0
        %897 = vmatpush1.msra.mxu0 0.0
        %898 = vmatprep.subr.mxu0 0.0
        %899 = vmatpush1.msra.mxu0 0.0
        %900 = vmatprep.subr.mxu0 0.0
        %901 = vmatpush1.msra.mxu0 0.0
        %902 = vmatprep.subr.mxu0 0.0
        %903 = vmatpush1.msra.mxu0 0.0
        %904 = vmatprep.subr.mxu0 0.0
        %905 = vmatpush1.msra.mxu0 0.0
        %906 = vmatprep.subr.mxu0 0.0
        %907 = vmatpush1.msra.mxu0 0.0
        %908 = vmatprep.subr.mxu0 0.0
        %909 = vmatpush1.msra.mxu0 0.0
        %910 = vmatprep.subr.mxu0 0.0
        %911 = vmatpush1.msra.mxu0 0.0
        %912 = vmatprep.subr.mxu0 0.0
        %913 = vmatpush1.msra.mxu0 0.0
        %914 = vmatprep.subr.mxu0 0.0
        %915 = vmatpush1.msra.mxu0 0.0
        %916 = vmatprep.subr.mxu0 0.0
        %917 = vmatpush1.msra.mxu0 0.0
        %918 = vmatprep.subr.mxu0 0.0
        %919 = vmatpush1.msra.mxu0 0.0
        %920 = vmatprep.subr.mxu0 0.0
        %921 = vmatpush1.msra.mxu0 0.0
        %922 = vmatprep.subr.mxu0 0.0
        %923 = vmatpush1.msra.mxu0 0.0
        %924 = vmatprep.subr.mxu0 0.0
        %925 = vmatpush1.msra.mxu0 0.0
        %926 = vmatprep.subr.mxu0 0.0
        %927 = vmatpush1.msra.mxu0 0.0
        %928 = vmatprep.subr.mxu0 0.0
        %929 = vmatpush1.msra.mxu0 0.0
        %930 = vmatprep.subr.mxu0 0.0
        %931 = vmatpush1.msra.mxu0 0.0
        %932 = vmatprep.subr.mxu0 0.0
        %933 = vmatpush1.msra.mxu0 0.0
        %934 = vmatprep.subr.mxu0 0.0
        %935 = vmatpush1.msra.mxu0 0.0
        %936 = vmatprep.mubr.f32.mxu0 0.0
        %v937 = vand.u32 %v862, 4294901760
        %v938 = vsub.f32 %v862, %v937
        %v939 = vand.u32 %v938, 4294901760
        %v940 = vsub.f32 %v938, %v939
        %v941 = vand.u32 %v940, 4294901760
        %942 = vmatmul.mubr.f32.gmra.mrb[0].mxu0 %v941
        %v943 = vpop.f32.mrb[0].mxu0
        %v944 = vadd.f32 0.0, %v943
        %v945 = vpop.f32.mrb[0].mxu0
        %946 = vdwg.mxu0
        %947 = vmatprep.subr.mxu0 0.0
        %v948 = vand.u32 %v294, 4294901760
        %v949 = vsub.f32 %v294, %v948
        %v950 = vand.u32 %v949, 4294901760
        %v951 = vsub.f32 %v949, %v950
        %v952 = vand.u32 %v951, 4294901760
        %953 = vmatpush1.msra.mxu0 %v952
        %954 = vmatprep.subr.mxu0 0.0
        %v955 = vand.u32 %v295, 4294901760
        %v956 = vsub.f32 %v295, %v955
        %v957 = vand.u32 %v956, 4294901760
        %v958 = vsub.f32 %v956, %v957
        %v959 = vand.u32 %v958, 4294901760
        %960 = vmatpush1.msra.mxu0 %v959
        %961 = vmatprep.subr.mxu0 0.0
        %v962 = vand.u32 %v296, 4294901760
        %v963 = vsub.f32 %v296, %v962
        %v964 = vand.u32 %v963, 4294901760
        %v965 = vsub.f32 %v963, %v964
        %v966 = vand.u32 %v965, 4294901760
        %967 = vmatpush1.msra.mxu0 %v966
        %968 = vmatprep.subr.mxu0 0.0
        %v969 = vand.u32 %v297, 4294901760
        %v970 = vsub.f32 %v297, %v969
        %v971 = vand.u32 %v970, 4294901760
        %v972 = vsub.f32 %v970, %v971
        %v973 = vand.u32 %v972, 4294901760
        %974 = vmatpush1.msra.mxu0 %v973
        %975 = vmatprep.subr.mxu0 0.0
        %v976 = vand.u32 %v298, 4294901760
        %v977 = vsub.f32 %v298, %v976
        %v978 = vand.u32 %v977, 4294901760
        %v979 = vsub.f32 %v977, %v978
        %v980 = vand.u32 %v979, 4294901760
        %981 = vmatpush1.msra.mxu0 %v980
        %982 = vmatprep.subr.mxu0 0.0
        %v983 = vand.u32 %v299, 4294901760
        %v984 = vsub.f32 %v299, %v983
        %v985 = vand.u32 %v984, 4294901760
        %v986 = vsub.f32 %v984, %v985
        %v987 = vand.u32 %v986, 4294901760
        %988 = vmatpush1.msra.mxu0 %v987
        %989 = vmatprep.subr.mxu0 0.0
        %v990 = vand.u32 %v300, 4294901760
        %v991 = vsub.f32 %v300, %v990
        %v992 = vand.u32 %v991, 4294901760
        %v993 = vsub.f32 %v991, %v992
        %v994 = vand.u32 %v993, 4294901760
        %995 = vmatpush1.msra.mxu0 %v994
        %996 = vmatprep.subr.mxu0 0.0
        %v997 = vand.u32 %v301, 4294901760
        %v998 = vsub.f32 %v301, %v997
        %v999 = vand.u32 %v998, 4294901760
        %v1000 = vsub.f32 %v998, %v999
        %v1001 = vand.u32 %v1000, 4294901760
        %1002 = vmatpush1.msra.mxu0 %v1001
        %1003 = vmatprep.subr.mxu0 0.0
        %1004 = vmatpush1.msra.mxu0 0.0
        %1005 = vmatprep.subr.mxu0 0.0
        %1006 = vmatpush1.msra.mxu0 0.0
        %1007 = vmatprep.subr.mxu0 0.0
        %1008 = vmatpush1.msra.mxu0 0.0
        %1009 = vmatprep.subr.mxu0 0.0
        %1010 = vmatpush1.msra.mxu0 0.0
        %1011 = vmatprep.subr.mxu0 0.0
        %1012 = vmatpush1.msra.mxu0 0.0
        %1013 = vmatprep.subr.mxu0 0.0
        %1014 = vmatpush1.msra.mxu0 0.0
        %1015 = vmatprep.subr.mxu0 0.0
        %1016 = vmatpush1.msra.mxu0 0.0
        %1017 = vmatprep.subr.mxu0 0.0
        %1018 = vmatpush1.msra.mxu0 0.0
        %1019 = vmatprep.subr.mxu0 0.0
        %1020 = vmatpush1.msra.mxu0 0.0
        %1021 = vmatprep.subr.mxu0 0.0
        %1022 = vmatpush1.msra.mxu0 0.0
        %1023 = vmatprep.subr.mxu0 0.0
        %1024 = vmatpush1.msra.mxu0 0.0
        %1025 = vmatprep.subr.mxu0 0.0
        %1026 = vmatpush1.msra.mxu0 0.0
        %1027 = vmatprep.subr.mxu0 0.0
        %1028 = vmatpush1.msra.mxu0 0.0
        %1029 = vmatprep.subr.mxu0 0.0
        %1030 = vmatpush1.msra.mxu0 0.0
        %1031 = vmatprep.subr.mxu0 0.0
        %1032 = vmatpush1.msra.mxu0 0.0
        %1033 = vmatprep.subr.mxu0 0.0
        %1034 = vmatpush1.msra.mxu0 0.0
        %1035 = vmatprep.subr.mxu0 0.0
        %1036 = vmatpush1.msra.mxu0 0.0
        %1037 = vmatprep.subr.mxu0 0.0
        %1038 = vmatpush1.msra.mxu0 0.0
        %1039 = vmatprep.subr.mxu0 0.0
        %1040 = vmatpush1.msra.mxu0 0.0
        %1041 = vmatprep.subr.mxu0 0.0
        %1042 = vmatpush1.msra.mxu0 0.0
        %1043 = vmatprep.subr.mxu0 0.0
        %1044 = vmatpush1.msra.mxu0 0.0
        %1045 = vmatprep.subr.mxu0 0.0
        %1046 = vmatpush1.msra.mxu0 0.0
        %1047 = vmatprep.subr.mxu0 0.0
        %1048 = vmatpush1.msra.mxu0 0.0
        %1049 = vmatprep.subr.mxu0 0.0
        %1050 = vmatpush1.msra.mxu0 0.0
        %1051 = vmatprep.mubr.f32.mxu0 0.0
        %v1052 = vand.u32 %v862, 4294901760
        %1053 = vmatmul.mubr.f32.gmra.mrb[0].mxu0 %v1052
        %v1054 = vpop.f32.mrb[0].mxu0
        %v1055 = vadd.f32 %v944, %v1054
        %v1056 = vpop.f32.mrb[0].mxu0
        %1057 = vdwg.mxu0
        %1058 = vmatprep.subr.mxu0 0.0
        %v1059 = vand.u32 %v294, 4294901760
        %v1060 = vsub.f32 %v294, %v1059
        %1061 = vmatpush1.msra.mxu0 %v1060
        %1062 = vmatprep.subr.mxu0 0.0
        %v1063 = vand.u32 %v295, 4294901760
        %v1064 = vsub.f32 %v295, %v1063
        %1065 = vmatpush1.msra.mxu0 %v1064
        %1066 = vmatprep.subr.mxu0 0.0
        %v1067 = vand.u32 %v296, 4294901760
        %v1068 = vsub.f32 %v296, %v1067
        %1069 = vmatpush1.msra.mxu0 %v1068
        %1070 = vmatprep.subr.mxu0 0.0
        %v1071 = vand.u32 %v297, 4294901760
        %v1072 = vsub.f32 %v297, %v1071
        %1073 = vmatpush1.msra.mxu0 %v1072
        %1074 = vmatprep.subr.mxu0 0.0
        %v1075 = vand.u32 %v298, 4294901760
        %v1076 = vsub.f32 %v298, %v1075
        %1077 = vmatpush1.msra.mxu0 %v1076
        %1078 = vmatprep.subr.mxu0 0.0
        %v1079 = vand.u32 %v299, 4294901760
        %v1080 = vsub.f32 %v299, %v1079
        %1081 = vmatpush1.msra.mxu0 %v1080
        %1082 = vmatprep.subr.mxu0 0.0
        %v1083 = vand.u32 %v300, 4294901760
        %v1084 = vsub.f32 %v300, %v1083
        %1085 = vmatpush1.msra.mxu0 %v1084
        %1086 = vmatprep.subr.mxu0 0.0
        %v1087 = vand.u32 %v301, 4294901760
        %v1088 = vsub.f32 %v301, %v1087
        %1089 = vmatpush1.msra.mxu0 %v1088
        %1090 = vmatprep.subr.mxu0 0.0
        %1091 = vmatpush1.msra.mxu0 0.0
        %1092 = vmatprep.subr.mxu0 0.0
        %1093 = vmatpush1.msra.mxu0 0.0
        %1094 = vmatprep.subr.mxu0 0.0
        %1095 = vmatpush1.msra.mxu0 0.0
        %1096 = vmatprep.subr.mxu0 0.0
        %1097 = vmatpush1.msra.mxu0 0.0
        %1098 = vmatprep.subr.mxu0 0.0
        %1099 = vmatpush1.msra.mxu0 0.0
        %1100 = vmatprep.subr.mxu0 0.0
        %1101 = vmatpush1.msra.mxu0 0.0
        %1102 = vmatprep.subr.mxu0 0.0
        %1103 = vmatpush1.msra.mxu0 0.0
        %1104 = vmatprep.subr.mxu0 0.0
        %1105 = vmatpush1.msra.mxu0 0.0
        %1106 = vmatprep.subr.mxu0 0.0
        %1107 = vmatpush1.msra.mxu0 0.0
        %1108 = vmatprep.subr.mxu0 0.0
        %1109 = vmatpush1.msra.mxu0 0.0
        %1110 = vmatprep.subr.mxu0 0.0
        %1111 = vmatpush1.msra.mxu0 0.0
        %1112 = vmatprep.subr.mxu0 0.0
        %1113 = vmatpush1.msra.mxu0 0.0
        %1114 = vmatprep.subr.mxu0 0.0
        %1115 = vmatpush1.msra.mxu0 0.0
        %1116 = vmatprep.subr.mxu0 0.0
        %1117 = vmatpush1.msra.mxu0 0.0
        %1118 = vmatprep.subr.mxu0 0.0
        %1119 = vmatpush1.msra.mxu0 0.0
        %1120 = vmatprep.subr.mxu0 0.0
        %1121 = vmatpush1.msra.mxu0 0.0
        %1122 = vmatprep.subr.mxu0 0.0
        %1123 = vmatpush1.msra.mxu0 0.0
        %1124 = vmatprep.subr.mxu0 0.0
        %1125 = vmatpush1.msra.mxu0 0.0
        %1126 = vmatprep.subr.mxu0 0.0
        %1127 = vmatpush1.msra.mxu0 0.0
        %1128 = vmatprep.subr.mxu0 0.0
        %1129 = vmatpush1.msra.mxu0 0.0
        %1130 = vmatprep.subr.mxu0 0.0
        %1131 = vmatpush1.msra.mxu0 0.0
        %1132 = vmatprep.subr.mxu0 0.0
        %1133 = vmatpush1.msra.mxu0 0.0
        %1134 = vmatprep.subr.mxu0 0.0
        %1135 = vmatpush1.msra.mxu0 0.0
        %1136 = vmatprep.subr.mxu0 0.0
        %1137 = vmatpush1.msra.mxu0 0.0
        %1138 = vmatprep.mubr.f32.mxu0 0.0
        %v1139 = vand.u32 %v862, 4294901760
        %v1140 = vsub.f32 %v862, %v1139
        %1141 = vmatmul.mubr.f32.gmra.mrb[0].mxu0 %v1140
        %v1142 = vpop.f32.mrb[0].mxu0
        %v1143 = vadd.f32 %v1055, %v1142
        %v1144 = vpop.f32.mrb[0].mxu0
        %1145 = vdwg.mxu0
        %1146 = vmatprep.subr.mxu0 0.0
        %v1147 = vand.u32 %v294, 4294901760
        %1148 = vmatpush1.msra.mxu0 %v1147
        %1149 = vmatprep.subr.mxu0 0.0
        %v1150 = vand.u32 %v295, 4294901760
        %1151 = vmatpush1.msra.mxu0 %v1150
        %1152 = vmatprep.subr.mxu0 0.0
        %v1153 = vand.u32 %v296, 4294901760
        %1154 = vmatpush1.msra.mxu0 %v1153
        %1155 = vmatprep.subr.mxu0 0.0
        %v1156 = vand.u32 %v297, 4294901760
        %1157 = vmatpush1.msra.mxu0 %v1156
        %1158 = vmatprep.subr.mxu0 0.0
        %v1159 = vand.u32 %v298, 4294901760
        %1160 = vmatpush1.msra.mxu0 %v1159
        %1161 = vmatprep.subr.mxu0 0.0
        %v1162 = vand.u32 %v299, 4294901760
        %1163 = vmatpush1.msra.mxu0 %v1162
        %1164 = vmatprep.subr.mxu0 0.0
        %v1165 = vand.u32 %v300, 4294901760
        %1166 = vmatpush1.msra.mxu0 %v1165
        %1167 = vmatprep.subr.mxu0 0.0
        %v1168 = vand.u32 %v301, 4294901760
        %1169 = vmatpush1.msra.mxu0 %v1168
        %1170 = vmatprep.subr.mxu0 0.0
        %1171 = vmatpush1.msra.mxu0 0.0
        %1172 = vmatprep.subr.mxu0 0.0
        %1173 = vmatpush1.msra.mxu0 0.0
        %1174 = vmatprep.subr.mxu0 0.0
        %1175 = vmatpush1.msra.mxu0 0.0
        %1176 = vmatprep.subr.mxu0 0.0
        %1177 = vmatpush1.msra.mxu0 0.0
        %1178 = vmatprep.subr.mxu0 0.0
        %1179 = vmatpush1.msra.mxu0 0.0
        %1180 = vmatprep.subr.mxu0 0.0
        %1181 = vmatpush1.msra.mxu0 0.0
        %1182 = vmatprep.subr.mxu0 0.0
        %1183 = vmatpush1.msra.mxu0 0.0
        %1184 = vmatprep.subr.mxu0 0.0
        %1185 = vmatpush1.msra.mxu0 0.0
        %1186 = vmatprep.subr.mxu0 0.0
        %1187 = vmatpush1.msra.mxu0 0.0
        %1188 = vmatprep.subr.mxu0 0.0
        %1189 = vmatpush1.msra.mxu0 0.0
        %1190 = vmatprep.subr.mxu0 0.0
        %1191 = vmatpush1.msra.mxu0 0.0
        %1192 = vmatprep.subr.mxu0 0.0
        %1193 = vmatpush1.msra.mxu0 0.0
        %1194 = vmatprep.subr.mxu0 0.0
        %1195 = vmatpush1.msra.mxu0 0.0
        %1196 = vmatprep.subr.mxu0 0.0
        %1197 = vmatpush1.msra.mxu0 0.0
        %1198 = vmatprep.subr.mxu0 0.0
        %1199 = vmatpush1.msra.mxu0 0.0
        %1200 = vmatprep.subr.mxu0 0.0
        %1201 = vmatpush1.msra.mxu0 0.0
        %1202 = vmatprep.subr.mxu0 0.0
        %1203 = vmatpush1.msra.mxu0 0.0
        %1204 = vmatprep.subr.mxu0 0.0
        %1205 = vmatpush1.msra.mxu0 0.0
        %1206 = vmatprep.subr.mxu0 0.0
        %1207 = vmatpush1.msra.mxu0 0.0
        %1208 = vmatprep.subr.mxu0 0.0
        %1209 = vmatpush1.msra.mxu0 0.0
        %1210 = vmatprep.subr.mxu0 0.0
        %1211 = vmatpush1.msra.mxu0 0.0
        %1212 = vmatprep.subr.mxu0 0.0
        %1213 = vmatpush1.msra.mxu0 0.0
        %1214 = vmatprep.subr.mxu0 0.0
        %1215 = vmatpush1.msra.mxu0 0.0
        %1216 = vmatprep.subr.mxu0 0.0
        %1217 = vmatpush1.msra.mxu0 0.0
        %1218 = vmatprep.mubr.f32.mxu0 0.0
        %v1219 = vand.u32 %v862, 4294901760
        %v1220 = vsub.f32 %v862, %v1219
        %v1221 = vand.u32 %v1220, 4294901760
        %1222 = vmatmul.mubr.f32.gmra.mrb[0].mxu0 %v1221
        %v1223 = vpop.f32.mrb[0].mxu0
        %v1224 = vadd.f32 %v1143, %v1223
        %v1225 = vpop.f32.mrb[0].mxu0
        %1226 = vdwg.mxu0
        %1227 = vmatprep.subr.mxu0 0.0
        %v1228 = vand.u32 %v294, 4294901760
        %v1229 = vsub.f32 %v294, %v1228
        %v1230 = vand.u32 %v1229, 4294901760
        %1231 = vmatpush1.msra.mxu0 %v1230
        %1232 = vmatprep.subr.mxu0 0.0
        %v1233 = vand.u32 %v295, 4294901760
        %v1234 = vsub.f32 %v295, %v1233
        %v1235 = vand.u32 %v1234, 4294901760
        %1236 = vmatpush1.msra.mxu0 %v1235
        %1237 = vmatprep.subr.mxu0 0.0
        %v1238 = vand.u32 %v296, 4294901760
        %v1239 = vsub.f32 %v296, %v1238
        %v1240 = vand.u32 %v1239, 4294901760
        %1241 = vmatpush1.msra.mxu0 %v1240
        %1242 = vmatprep.subr.mxu0 0.0
        %v1243 = vand.u32 %v297, 4294901760
        %v1244 = vsub.f32 %v297, %v1243
        %v1245 = vand.u32 %v1244, 4294901760
        %1246 = vmatpush1.msra.mxu0 %v1245
        %1247 = vmatprep.subr.mxu0 0.0
        %v1248 = vand.u32 %v298, 4294901760
        %v1249 = vsub.f32 %v298, %v1248
        %v1250 = vand.u32 %v1249, 4294901760
        %1251 = vmatpush1.msra.mxu0 %v1250
        %1252 = vmatprep.subr.mxu0 0.0
        %v1253 = vand.u32 %v299, 4294901760
        %v1254 = vsub.f32 %v299, %v1253
        %v1255 = vand.u32 %v1254, 4294901760
        %1256 = vmatpush1.msra.mxu0 %v1255
        %1257 = vmatprep.subr.mxu0 0.0
        %v1258 = vand.u32 %v300, 4294901760
        %v1259 = vsub.f32 %v300, %v1258
        %v1260 = vand.u32 %v1259, 4294901760
        %1261 = vmatpush1.msra.mxu0 %v1260
        %1262 = vmatprep.subr.mxu0 0.0
        %v1263 = vand.u32 %v301, 4294901760
        %v1264 = vsub.f32 %v301, %v1263
        %v1265 = vand.u32 %v1264, 4294901760
        %1266 = vmatpush1.msra.mxu0 %v1265
        %1267 = vmatprep.subr.mxu0 0.0
        %1268 = vmatpush1.msra.mxu0 0.0
        %1269 = vmatprep.subr.mxu0 0.0
        %1270 = vmatpush1.msra.mxu0 0.0
        %1271 = vmatprep.subr.mxu0 0.0
        %1272 = vmatpush1.msra.mxu0 0.0
        %1273 = vmatprep.subr.mxu0 0.0
        %1274 = vmatpush1.msra.mxu0 0.0
        %1275 = vmatprep.subr.mxu0 0.0
        %1276 = vmatpush1.msra.mxu0 0.0
        %1277 = vmatprep.subr.mxu0 0.0
        %1278 = vmatpush1.msra.mxu0 0.0
        %1279 = vmatprep.subr.mxu0 0.0
        %1280 = vmatpush1.msra.mxu0 0.0
        %1281 = vmatprep.subr.mxu0 0.0
        %1282 = vmatpush1.msra.mxu0 0.0
        %1283 = vmatprep.subr.mxu0 0.0
        %1284 = vmatpush1.msra.mxu0 0.0
        %1285 = vmatprep.subr.mxu0 0.0
        %1286 = vmatpush1.msra.mxu0 0.0
        %1287 = vmatprep.subr.mxu0 0.0
        %1288 = vmatpush1.msra.mxu0 0.0
        %1289 = vmatprep.subr.mxu0 0.0
        %1290 = vmatpush1.msra.mxu0 0.0
        %1291 = vmatprep.subr.mxu0 0.0
        %1292 = vmatpush1.msra.mxu0 0.0
        %1293 = vmatprep.subr.mxu0 0.0
        %1294 = vmatpush1.msra.mxu0 0.0
        %1295 = vmatprep.subr.mxu0 0.0
        %1296 = vmatpush1.msra.mxu0 0.0
        %1297 = vmatprep.subr.mxu0 0.0
        %1298 = vmatpush1.msra.mxu0 0.0
        %1299 = vmatprep.subr.mxu0 0.0
        %1300 = vmatpush1.msra.mxu0 0.0
        %1301 = vmatprep.subr.mxu0 0.0
        %1302 = vmatpush1.msra.mxu0 0.0
        %1303 = vmatprep.subr.mxu0 0.0
        %1304 = vmatpush1.msra.mxu0 0.0
        %1305 = vmatprep.subr.mxu0 0.0
        %1306 = vmatpush1.msra.mxu0 0.0
        %1307 = vmatprep.subr.mxu0 0.0
        %1308 = vmatpush1.msra.mxu0 0.0
        %1309 = vmatprep.subr.mxu0 0.0
        %1310 = vmatpush1.msra.mxu0 0.0
        %1311 = vmatprep.subr.mxu0 0.0
        %1312 = vmatpush1.msra.mxu0 0.0
        %1313 = vmatprep.subr.mxu0 0.0
        %1314 = vmatpush1.msra.mxu0 0.0
        %1315 = vmatprep.mubr.f32.mxu0 0.0
        %v1316 = vand.u32 %v862, 4294901760
        %1317 = vmatmul.mubr.f32.gmra.mrb[0].mxu0 %v1316
        %v1318 = vpop.f32.mrb[0].mxu0
        %v1319 = vadd.f32 %v1224, %v1318
        %v1320 = vpop.f32.mrb[0].mxu0
        %1321 = vdwg.mxu0
        %1322 = vmatprep.subr.mxu0 0.0
        %v1323 = vand.u32 %v294, 4294901760
        %1324 = vmatpush1.msra.mxu0 %v1323
        %1325 = vmatprep.subr.mxu0 0.0
        %v1326 = vand.u32 %v295, 4294901760
        %1327 = vmatpush1.msra.mxu0 %v1326
        %1328 = vmatprep.subr.mxu0 0.0
        %v1329 = vand.u32 %v296, 4294901760
        %1330 = vmatpush1.msra.mxu0 %v1329
        %1331 = vmatprep.subr.mxu0 0.0
        %v1332 = vand.u32 %v297, 4294901760
        %1333 = vmatpush1.msra.mxu0 %v1332
        %1334 = vmatprep.subr.mxu0 0.0
        %v1335 = vand.u32 %v298, 4294901760
        %1336 = vmatpush1.msra.mxu0 %v1335
        %1337 = vmatprep.subr.mxu0 0.0
        %v1338 = vand.u32 %v299, 4294901760
        %1339 = vmatpush1.msra.mxu0 %v1338
        %1340 = vmatprep.subr.mxu0 0.0
        %v1341 = vand.u32 %v300, 4294901760
        %1342 = vmatpush1.msra.mxu0 %v1341
        %1343 = vmatprep.subr.mxu0 0.0
        %v1344 = vand.u32 %v301, 4294901760
        %1345 = vmatpush1.msra.mxu0 %v1344
        %1346 = vmatprep.subr.mxu0 0.0
        %1347 = vmatpush1.msra.mxu0 0.0
        %1348 = vmatprep.subr.mxu0 0.0
        %1349 = vmatpush1.msra.mxu0 0.0
        %1350 = vmatprep.subr.mxu0 0.0
        %1351 = vmatpush1.msra.mxu0 0.0
        %1352 = vmatprep.subr.mxu0 0.0
        %1353 = vmatpush1.msra.mxu0 0.0
        %1354 = vmatprep.subr.mxu0 0.0
        %1355 = vmatpush1.msra.mxu0 0.0
        %1356 = vmatprep.subr.mxu0 0.0
        %1357 = vmatpush1.msra.mxu0 0.0
        %1358 = vmatprep.subr.mxu0 0.0
        %1359 = vmatpush1.msra.mxu0 0.0
        %1360 = vmatprep.subr.mxu0 0.0
        %1361 = vmatpush1.msra.mxu0 0.0
        %1362 = vmatprep.subr.mxu0 0.0
        %1363 = vmatpush1.msra.mxu0 0.0
        %1364 = vmatprep.subr.mxu0 0.0
        %1365 = vmatpush1.msra.mxu0 0.0
        %1366 = vmatprep.subr.mxu0 0.0
        %1367 = vmatpush1.msra.mxu0 0.0
        %1368 = vmatprep.subr.mxu0 0.0
        %1369 = vmatpush1.msra.mxu0 0.0
        %1370 = vmatprep.subr.mxu0 0.0
        %1371 = vmatpush1.msra.mxu0 0.0
        %1372 = vmatprep.subr.mxu0 0.0
        %1373 = vmatpush1.msra.mxu0 0.0
        %1374 = vmatprep.subr.mxu0 0.0
        %1375 = vmatpush1.msra.mxu0 0.0
        %1376 = vmatprep.subr.mxu0 0.0
        %1377 = vmatpush1.msra.mxu0 0.0
        %1378 = vmatprep.subr.mxu0 0.0
        %1379 = vmatpush1.msra.mxu0 0.0
        %1380 = vmatprep.subr.mxu0 0.0
        %1381 = vmatpush1.msra.mxu0 0.0
        %1382 = vmatprep.subr.mxu0 0.0
        %1383 = vmatpush1.msra.mxu0 0.0
        %1384 = vmatprep.subr.mxu0 0.0
        %1385 = vmatpush1.msra.mxu0 0.0
        %1386 = vmatprep.subr.mxu0 0.0
        %1387 = vmatpush1.msra.mxu0 0.0
        %1388 = vmatprep.subr.mxu0 0.0
        %1389 = vmatpush1.msra.mxu0 0.0
        %1390 = vmatprep.subr.mxu0 0.0
        %1391 = vmatpush1.msra.mxu0 0.0
        %1392 = vmatprep.subr.mxu0 0.0
        %1393 = vmatpush1.msra.mxu0 0.0
        %1394 = vmatprep.mubr.f32.mxu0 0.0
        %v1395 = vand.u32 %v862, 4294901760
        %1396 = vmatmul.mubr.f32.gmra.mrb[0].mxu0 %v1395
        %v1397 = vpop.f32.mrb[0].mxu0
        %v1398 = vadd.f32 %v1319, %v1397
        %v1399 = vpop.f32.mrb[0].mxu0
        %1400 = vdwg.mxu0
        %v1401 = vadd.f32 %v859, %v1398
        %1402 = vst [vmem:[#allocation3] sm:$0x1] %v1401
        %p1403 = scmp.eq.s32.totalorder %s33, 1
        // Predicated region
        $region41: #{tpu_custom_call.1} parent=27 // pred_check
          %p1404 = pneg %p1403
        $region42: #{tpu_custom_call.1} parent=27 // pred_check_branch
          %1406 = sbr.rel (%p1404) target = $region44
        $region43: #{tpu_custom_call.1} parent=27 // pred_region
          %v1407 = vld [vmem:[#allocation4] sm:$0x1]
          %v1408 = vrsqrt.pop %v1407
          %v1409 = vmul.f32 %v1407, %v1408
          %vm1410 = vcmp.eq.f32.partialorder %v1407, inf
          %v1411 = vsel %vm1410, %v1407, %v1409
          %vm1412 = vcmp.eq.f32.partialorder %v1407, 0.0
          %v1413 = vand.u32 %v1407, 2147483648
          %v1414 = vsel %vm1412, %v1413, %v1411
          %v1415 = vmax.f32 %v1414, 1e-12
          %v1416 = vld [vmem:[#allocation2] sm:$0x3]
          %v1418 = vlaneseq
          %v1419 = vshrl.u32 %v1418, 7
          %v1420 = vsub.s32 0, %v1419
          %v1421 = vrot.slane %v1415, %v1420
          %1422 = vset.pattern.permute.xlu0 0
          %1423 = vperm.xlu0 %1422, %v1421
          %v1424 = vpop.permute.xlu0 %1423
          %v1426 = vrcp.pop %v1424
          %v1427 = vmul.f32 %v1416, %v1426
          %vm1428 = vcmask 517120
          %1429 = vst.msk [vmem:[%s271] sm:$0x3] %vm1428, %v1427
          %v1430 = vld [vmem:[#allocation3] sm:$0x1]
          %1431 = vset.pattern.permute.xlu0 0
          %1432 = vperm.xlu0 %1431, %v1415
          %v1433 = vpop.permute.xlu0 %1432
          %v1435 = vlaneseq
          %v1436 = vshrl.u32 %v1435, 7
          %v1437 = vsub.s32 0, %v1436
          %v1438 = vrot.slane %v1433, %v1437
          %v1439 = vrcp.pop %v1438
          %v1440 = vmul.f32 %v1430, %v1439
          %v1441 = vmul.f32 %v1440, %v1440
          %vm1442 = vcmask 1040384
          %v1443 = vsel %vm1442, %v1441, 0.0
          %1444 = vadd.xlane.f32.xlu0 %v1443
          %v1445 = vpop.xlane.xlu0 %1444
          %v1446 = vrot.slane %v1445, 4
          %v1447 = vadd.f32 %v1445, %v1446
          %v1448 = vrot.slane %v1447, 2
          %v1449 = vadd.f32 %v1447, %v1448
          %v1450 = vrot.slane %v1449, 1
          %v1451 = vadd.f32 %v1449, %v1450
          %s1452 = vtos %v1451
          %v1453 = vstv %s1452
          %v1454 = vrsqrt.pop %v1453
          %v1455 = vmul.f32 %v1453, %v1454
          %vm1456 = vcmp.eq.f32.partialorder %v1453, inf
          %v1457 = vsel %vm1456, %v1453, %v1455
          %vm1458 = vcmp.eq.f32.partialorder %v1453, 0.0
          %v1459 = vand.u32 %v1453, 2147483648
          %v1460 = vsel %vm1458, %v1459, %v1457
          %v1461 = vmax.f32 %v1460, 1e-12
          %v1462 = vrcp.pop %v1461
          %v1463 = vmul.f32 %v1440, %v1462
          %1464 = vst [vmem:[%s277] sm:$0x1] %v1463
          %v1465 = vmul.f32 %v1453, %v1462
          %v1466 = vadd.f32 %v1465, 1e-12
          %1467 = vst.msk [vmem:[%s283] sm:$0x1] %vm857, %v1466
        $region44: #{tpu_custom_call.1} parent=27 // pred_fallthru
          _
        %s1468 = sand.u32 %s104, 1
        %s1469 = scalar_lea.sflag [#allocation7], %s1468
        %s1470 = sand.u32 %s104, 1
        %s1471 = smul.addr %s1470, 2
        %s1472 = scalar_lea.vmem [#allocation10], %s1471
        %s1473 = sand.u32 %s28, 1
        %s1474 = scalar_lea.sflag [#allocation12], %s1473
        %s1475 = sand.u32 %s130, 1
        %s1476 = scalar_lea.vmem [#allocation11], %s1475
        %s1477 = sand.u32 %s28, 1
        %s1478 = scalar_lea.sflag [#allocation12], %s1477
        %s1479 = sand.u32 %s156, 1
        %s1480 = scalar_lea.vmem [#allocation13], %s1479
        // Predicated region
        $region45: #{tpu_custom_call.1} parent=27 // pred_check
          %p1481 = pneg %p114
        $region46: #{tpu_custom_call.1} parent=27 // pred_check_branch
          %1483 = sbr.rel (%p1481) target = $region48
        $region47: #{tpu_custom_call.1} parent=27 // pred_region
          %s1485 = ssub.s32 32, 32
          %1486 = vsyncadd %s1469, %s1485
          %s1487 = smul.addr %s32, 32
          %s1488 = scalar_lea.hbm %s2, %s1487
          %s1490 = sshll.u32 %s1472, 4
          %s1491 = int_to_ptr.vmem [resolvable:$true] %s1490
          %1493 = dma.vmem_to_hbm [thread:$0]  %s1491, 32, %s1488, %s1469
        $region48: #{tpu_custom_call.1} parent=27 // pred_fallthru
          _
        // Predicated region
        $region49: #{tpu_custom_call.1} parent=27 // pred_check
          %p1494 = pneg %p140
        $region50: #{tpu_custom_call.1} parent=27 // pred_check_branch
          %1496 = sbr.rel (%p1494) target = $region52
        $region51: #{tpu_custom_call.1} parent=27 // pred_region
          %s1498 = ssub.s32 16, 16
          %1499 = vsyncadd %s1474, %s1498
          %s1500 = smul.addr %s32, 16
          %s1501 = scalar_lea.hbm %s3, %s1500
          %s1503 = sshll.u32 %s1476, 4
          %s1504 = int_to_ptr.vmem [resolvable:$true] %s1503
          %1506 = dma.vmem_to_hbm [thread:$0]  %s1504, 16, %s1501, %s1474
        $region52: #{tpu_custom_call.1} parent=27 // pred_fallthru
          _
        // Predicated region
        $region53: #{tpu_custom_call.1} parent=27 // pred_check
          %p1507 = pneg %p166
        $region54: #{tpu_custom_call.1} parent=27 // pred_check_branch
          %1509 = sbr.rel (%p1507) target = $region56
        $region55: #{tpu_custom_call.1} parent=27 // pred_region
          %s1511 = ssub.s32 16, 16
          %1512 = vsyncadd %s1478, %s1511
          %s1513 = smul.addr %s32, 16
          %s1514 = scalar_lea.hbm %s4, %s1513
          %s1516 = sshll.u32 %s1480, 4
          %s1517 = int_to_ptr.vmem [resolvable:$true] %s1516
          %1519 = dma.vmem_to_hbm [thread:$0]  %s1517, 16, %s1514, %s1478
        $region56: #{tpu_custom_call.1} parent=27 // pred_fallthru
          _
      $region28: #{tpu_custom_call.1} parent=5 // pred_fallthru
        _
      %p1520 = scmp.le.s32.totalorder 2, %s23
      // Predicated region
      $region57: #{tpu_custom_call.1} parent=5 // pred_check
        %p1521 = pneg %p1520
      $region58: #{tpu_custom_call.1} parent=5 // pred_check_branch
        %1523 = sbr.rel (%p1521) target = $region60
      $region59: #{tpu_custom_call.1} parent=5 // pred_region
        %s1524 = ssub.s32 %s23, 2
        // Predicated region
        $region61: #{tpu_custom_call.1} parent=59 // pred_check
          %p1525 = pneg %p120
        $region62: #{tpu_custom_call.1} parent=59 // pred_check_branch
          %1527 = sbr.rel (%p1525) target = $region64
        $region63: #{tpu_custom_call.1} parent=59 // pred_region
          %s1528 = sand.u32 %s105, 1
          %s1529 = scalar_lea.sflag [#allocation7], %s1528
          %s1530 = sand.u32 %s105, 1
          %s1531 = smul.addr %s1530, 2
          %s1532 = scalar_lea.vmem [#allocation10], %s1531
          %1533 = dma.done %s1529, 32
        $region64: #{tpu_custom_call.1} parent=59 // pred_fallthru
          _
        // Predicated region
        $region65: #{tpu_custom_call.1} parent=59 // pred_check
          %p1534 = pneg %p146
        $region66: #{tpu_custom_call.1} parent=59 // pred_check_branch
          %1536 = sbr.rel (%p1534) target = $region68
        $region67: #{tpu_custom_call.1} parent=59 // pred_region
          %s1537 = sand.u32 %s29, 1
          %s1538 = scalar_lea.sflag [#allocation12], %s1537
          %s1539 = sand.u32 %s131, 1
          %s1540 = scalar_lea.vmem [#allocation11], %s1539
          %1541 = dma.done %s1538, 16
        $region68: #{tpu_custom_call.1} parent=59 // pred_fallthru
          _
        // Predicated region
        $region69: #{tpu_custom_call.1} parent=59 // pred_check
          %p1542 = pneg %p172
        $region70: #{tpu_custom_call.1} parent=59 // pred_check_branch
          %1544 = sbr.rel (%p1542) target = $region72
        $region71: #{tpu_custom_call.1} parent=59 // pred_region
          %s1545 = sand.u32 %s29, 1
          %s1546 = scalar_lea.sflag [#allocation12], %s1545
          %s1547 = sand.u32 %s157, 1
          %s1548 = scalar_lea.vmem [#allocation13], %s1547
          %1549 = dma.done %s1546, 16
        $region72: #{tpu_custom_call.1} parent=59 // pred_fallthru
          _
      $region60: #{tpu_custom_call.1} parent=5 // pred_fallthru
        _
    $region6: #{tpu_custom_call.1} parent=1 // loop_footer
      %s27 = sadd.s32 1, %s23
    $region7: #{tpu_custom_call.1} parent=1 // loop_footer_branch
      %22 = sbr.rel target = $region3
    $region8: #{tpu_custom_call.1} parent=1 // loop_exit
      _
    %1550 = vsyncpa [#allocation6], 1
    %s1551 = scalar_lea.sflag [#allocation6], 1
    %1552 = vsyncpa %s1551, 1
    %1553 = vsyncpa [#allocation9], 1
    %s1554 = scalar_lea.sflag [#allocation9], 1
    %1555 = vsyncpa %s1554, 1
    %1556 = vsyncpa [#allocation7], 1
    %s1557 = scalar_lea.sflag [#allocation7], 1
    %1558 = vsyncpa %s1557, 1
    %1559 = vsyncpa [#allocation12], 1
    %s1560 = scalar_lea.sflag [#allocation12], 1
    %1561 = vsyncpa %s1560, 1

</llo_original>
